<compile_context>
chip_gen: v7x
topology: tpu7x:2x2x1
jax: 0.10.0
libtpu: 0.0.40
codegen_flags: <defaults>
</compile_context>

<pallas_src>
import functools
import math

import jax
import jax.numpy as jnp
from jax import lax
from jax.experimental import pallas as pl
from jax.experimental.pallas import tpu as pltpu


def _round_up(x, m):
    return ((x + m - 1) // m) * m


def _vmem_capacity_bytes():
    """Generation-aware VMEM capacity (128 MiB on v5e/v6e, 64 MiB per TC on v7x)."""
    try:
        return int(pltpu.get_tpu_info().vmem_capacity_bytes)
    except Exception:
        return 64 * 1024 * 1024  # conservative fallback (v7x-sized)


def _fused_gin_kernel(tm, tk,
                      adj_ref, x_ref, w1_ref, b1_ref, w2_ref, b2_ref,
                      out_ref, h_buf, acc_ref):
    """Fused multi-layer GIN forward.

    Grid = (L, row_tiles, k_tiles).  The layer axis is outermost so every layer sees
    the fully updated h of the previous layer; h is kept in a VMEM ping-pong scratch
    and never touches HBM.  The adjacency is streamed in (tm, tk) bf16 tiles and
    reduced over the k axis into an f32 accumulator.
    """
    l = pl.program_id(0)
    i = pl.program_id(1)
    k = pl.program_id(2)
    n_k = pl.num_programs(2)

    # One-time: seed the ping-pong hidden-state buffer with the input features.
    @pl.when((l == 0) & (i == 0) & (k == 0))
    def _():
        h_buf[0] = x_ref[...]

    src = lax.rem(l, 2)      # slot holding h^(l)   (input of this layer)
    dst = 1 - src            # slot receiving h^(l+1)

    # Start of the K reduction for this row tile: zero the accumulator.
    @pl.when(k == 0)
    def _():
        acc_ref[...] = jnp.zeros_like(acc_ref)

    # Neighbor sum: A[i-tile, k-tile] @ h[k-tile, :].
    # adj is stored as bf16 (values are exactly 0/1 -> lossless); the cast to f32 is
    # intentional so the matmul matches the f32 reference exactly.
    adj_tile = adj_ref[...].astype(jnp.float32)
    k_start = pl.multiple_of(k * tk, tk)
    h_k = h_buf[src, pl.ds(k_start, tk), :]
    acc_ref[...] += jnp.dot(adj_tile, h_k, preferred_element_type=jnp.float32)

    # Last K step: add the self term exactly once, run the 2-layer MLP, publish h.
    @pl.when(k == n_k - 1)
    def _():
        i_start = pl.multiple_of(i * tm, tm)
        h_self = h_buf[src, pl.ds(i_start, tm), :]
        agg = acc_ref[...] + h_self                    # (1 + eps) * h with eps = 0

        z = jnp.dot(agg, w1_ref[0], preferred_element_type=jnp.float32) + b1_ref[0]
        z = jnp.maximum(z, 0.0)
        y = jnp.dot(z, w2_ref[0], preferred_element_type=jnp.float32) + b2_ref[0]

        # Model-level activation feeds the NEXT layer (h^(l+1) = ReLU(y)); the raw y is
        # written to the output block — only the final layer's write survives in HBM.
        # TODO(synk): nn.Dropout is identity in eval mode; training-mode dropout not emitted.
        h_buf[dst, pl.ds(i_start, tm), :] = jnp.maximum(y, 0.0)
        out_ref[...] = y.astype(out_ref.dtype)


def gin_forward(adj, features, params):
    """Run the whole GIN stack (all GINConv layers) as ONE fused Pallas call."""
    n = adj.shape[0]
    n_layers = len(params)
    out_feats = params[-1][2].shape[1]

    # Pad every feature dim to one common lane-dense width (multiple of 128) so all
    # layers share a single stacked [L, F, F] weight layout, the MXU runs full-width,
    # and output stores are unmasked.
    all_dims = [features.shape[1]]
    for (w1, _, w2, _) in params:
        all_dims += [w1.shape[0], w1.shape[1], w2.shape[1]]
    feat = max(128, _round_up(max(all_dims), 128))

    # Generation-aware adjacency tiling and VMEM budget.
    cap = _vmem_capacity_bytes()
    vmem_limit = int(cap * 3 // 4)                       # ~96 MiB v5e/v6e, ~48 MiB v7x
    npad0 = _round_up(n, 128)
    if cap >= 96 * 1024 * 1024:                          # v5e / v6e (128 MiB VMEM)
        tm_t, tk_t = 512, 2048
    else:                                                # v7x (64 MiB) or unknown
        tm_t, tk_t = 256, 1024
    tm = min(tm_t, npad0)
    tk = min(tk_t, npad0)
    npad = _round_up(n, (tm * tk) // math.gcd(tm, tk))

    # TODO(synk): the h ping-pong scratch is 2*N*F*4 bytes of VMEM; for very large
    # graphs (N >~ 40k on v7x) intermediate h would need to spill to HBM instead.

    f32 = jnp.float32
    adj_p = jnp.zeros((npad, npad), jnp.bfloat16).at[:n, :n].set(
        adj.astype(jnp.bfloat16))                        # 0/1 values -> bf16 is lossless
    x_p = jnp.zeros((npad, feat), f32).at[:n, :features.shape[1]].set(
        features.astype(f32))

    w1s = jnp.zeros((n_layers, feat, feat), f32)
    b1s = jnp.zeros((n_layers, 1, feat), f32)
    w2s = jnp.zeros((n_layers, feat, feat), f32)
    b2s = jnp.zeros((n_layers, 1, feat), f32)
    for li, (w1, b1, w2, b2) in enumerate(params):
        w1s = w1s.at[li, :w1.shape[0], :w1.shape[1]].set(w1.astype(f32))
        b1s = b1s.at[li, :, :b1.shape[1]].set(b1.astype(f32))
        w2s = w2s.at[li, :w2.shape[0], :w2.shape[1]].set(w2.astype(f32))
        b2s = b2s.at[li, :, :b2.shape[1]].set(b2.astype(f32))

    grid = (n_layers, npad // tm, npad // tk)

    flops = n_layers * (2 * npad * npad * feat + 4 * npad * feat * feat)
    bytes_accessed = (n_layers * npad * npad * 2                 # adj streamed per layer (bf16)
                      + 2 * npad * feat * 4                      # features in + output out
                      + n_layers * (2 * feat * feat + 2 * feat) * 4)

    kernel = functools.partial(_fused_gin_kernel, tm, tk)

    out_p = pl.pallas_call(
        kernel,
        out_shape=jax.ShapeDtypeStruct((npad, feat), f32),
        grid_spec=pltpu.PrefetchScalarGridSpec(
            num_scalar_prefetch=0,
            grid=grid,
            in_specs=[
                pl.BlockSpec((tm, tk), lambda l, i, k: (i, k)),            # adj tile (bf16)
                pl.BlockSpec((npad, feat), lambda l, i, k: (0, 0)),        # features (resident)
                pl.BlockSpec((1, feat, feat), lambda l, i, k: (l, 0, 0)),  # W1 of layer l
                pl.BlockSpec((1, 1, feat), lambda l, i, k: (l, 0, 0)),     # b1 of layer l
                pl.BlockSpec((1, feat, feat), lambda l, i, k: (l, 0, 0)),  # W2 of layer l
                pl.BlockSpec((1, 1, feat), lambda l, i, k: (l, 0, 0)),     # b2 of layer l
            ],
            out_specs=pl.BlockSpec((tm, feat), lambda l, i, k: (i, 0)),
            scratch_shapes=[
                pltpu.VMEM((2, npad, feat), f32),   # h ping-pong (never touches HBM)
                pltpu.VMEM((tm, feat), f32),        # A @ h accumulator
            ],
        ),
        compiler_params=pltpu.CompilerParams(
            # layer & k axes carry reductions / cross-step VMEM state; the row axis also
            # shares the h scratch across layers, so it cannot be sharded across v7x's
            # two TensorCores -> all "arbitrary".
            dimension_semantics=("arbitrary", "arbitrary", "arbitrary"),
            vmem_limit_bytes=vmem_limit,
        ),
        cost_estimate=pl.CostEstimate(
            flops=flops, transcendentals=0, bytes_accessed=bytes_accessed),
    )(adj_p, x_p, w1s, b1s, w2s, b2s)

    return out_p[:n, :out_feats]


def init_linear(key, in_dim, out_dim):
    """Deterministic PyTorch-nn.Linear-style init: U(-1/sqrt(fan_in), 1/sqrt(fan_in))."""
    kw, kb = jax.random.split(key)
    bound = 1.0 / jnp.sqrt(jnp.float32(in_dim))
    w = jax.random.uniform(kw, (in_dim, out_dim), jnp.float32, -bound, bound)  # [in, out]
    b = jax.random.uniform(kb, (1, out_dim), jnp.float32, -bound, bound)
    return w, b


def init_gin_params(key, in_feats, h_feats, out_feats, n_layers):
    """Parameters for (n_layers + 1) GINConv layers, each holding a 2-layer MLP."""
    dims = [(in_feats, h_feats)] + [(h_feats, h_feats)] * (n_layers - 1) + [(h_feats, out_feats)]
    params = []
    for (di, do) in dims:
        key, k1, k2 = jax.random.split(key, 3)
        w1, b1 = init_linear(k1, di, do)
        w2, b2 = init_linear(k2, do, do)
        params.append((w1, b1, w2, b2))
    return params


def gin_forward_ref(adj, features, params):
    """Pure-JAX reference (full f32 precision) for sanity checking."""
    hp = jax.lax.Precision.HIGHEST
    h = features
    n_total = len(params)
    for i, (w1, b1, w2, b2) in enumerate(params):
        agg = jnp.dot(adj, h, precision=hp) + h
        z = jnp.maximum(jnp.dot(agg, w1, precision=hp) + b1, 0.0)
        h = jnp.dot(z, w2, precision=hp) + b2
        if i != n_total - 1:
            h = jnp.maximum(h, 0.0)
    return h


if __name__ == "__main__":
    key = jax.random.PRNGKey(0)

    # Small synthetic graph: 16 nodes, 8 input feats, 32 hidden, 8 output, n_layers=2
    N, IN_FEATS, H_FEATS, OUT_FEATS, N_LAYERS = 16, 8, 32, 8, 2

    key, k_adj, k_feat, k_params = jax.random.split(key, 4)

    # Random symmetric 0/1 adjacency without self-loops.
    logits = jax.random.uniform(k_adj, (N, N))
    adj = (logits + logits.T > 1.0).astype(jnp.float32)
    adj = adj * (1.0 - jnp.eye(N, dtype=jnp.float32))

    features = jax.random.normal(k_feat, (N, IN_FEATS), jnp.float32)
    params = init_gin_params(k_params, IN_FEATS, H_FEATS, OUT_FEATS, N_LAYERS)

    out = gin_forward(adj, features, params)
    out = jax.block_until_ready(out)

    ref = gin_forward_ref(adj, features, params)
    assert out.shape == (N, OUT_FEATS), out.shape
    max_err = float(jnp.max(jnp.abs(out - ref)))
    assert jnp.allclose(out, ref, atol=1e-3, rtol=1e-3), (
        f"mismatch vs pure-JAX reference, max abs err = {max_err}")

    print("KERNEL_OK")
</pallas_src>

<mosaic_0001>
module attributes {stable_mosaic.version = 11 : i64} {
  func.func @_fused_gin_kernel(%arg0: i32, %arg1: i32, %arg2: i32, %arg3: memref<128x128xbf16, #tpu.memory_space<vmem>>, %arg4: memref<128x128xf32, #tpu.memory_space<vmem>>, %arg5: memref<1x128x128xf32, #tpu.memory_space<vmem>>, %arg6: memref<1x1x128xf32, #tpu.memory_space<vmem>>, %arg7: memref<1x128x128xf32, #tpu.memory_space<vmem>>, %arg8: memref<1x1x128xf32, #tpu.memory_space<vmem>>, %arg9: memref<128x128xf32, #tpu.memory_space<vmem>>, %arg10: memref<2x128x128xf32, #tpu.memory_space<vmem>>, %arg11: memref<128x128xf32, #tpu.memory_space<vmem>>) attributes {dimension_semantics = [#tpu.dimension_semantics<arbitrary>, #tpu.dimension_semantics<arbitrary>, #tpu.dimension_semantics<arbitrary>], iteration_bounds = array<i64: 3, 1, 1>, scalar_prefetch = 0 : i64, scratch_operands = 2 : i64, tpu.core_type = #tpu.core_type<tc>, window_params = [{transform_indices = @transform_0, window_bounds = array<i64: 128, 128>}, {pipeline_mode = #tpu.pipeline_mode<synchronous>, transform_indices = @transform_1, window_bounds = array<i64: 128, 128>}, {transform_indices = @transform_2, window_bounds = array<i64: 1, 128, 128>}, {transform_indices = @transform_3, window_bounds = array<i64: 1, 1, 128>}, {transform_indices = @transform_4, window_bounds = array<i64: 1, 128, 128>}, {transform_indices = @transform_5, window_bounds = array<i64: 1, 1, 128>}, {transform_indices = @transform_6, window_bounds = array<i64: 128, 128>}]} {
    %c0_i32 = arith.constant 0 : i32
    %0 = arith.cmpi eq, %arg0, %c0_i32 : i32
    %c0_i32_0 = arith.constant 0 : i32
    %1 = arith.cmpi eq, %arg1, %c0_i32_0 : i32
    %2 = arith.andi %0, %1 : i1
    %c0_i32_1 = arith.constant 0 : i32
    %3 = arith.cmpi eq, %arg2, %c0_i32_1 : i32
    %4 = arith.andi %2, %3 : i1
    %5 = arith.extui %4 : i1 to i32
    %c0_i32_2 = arith.constant 0 : i32
    %6 = arith.cmpi ne, %5, %c0_i32_2 : i32
    scf.if %6 {
      %c0_13 = arith.constant 0 : index
      %c0_14 = arith.constant 0 : index
      %27 = vector.load %arg4[%c0_13, %c0_14] : memref<128x128xf32, #tpu.memory_space<vmem>>, vector<128x128xf32>
      %c0_15 = arith.constant 0 : index
      %c0_16 = arith.constant 0 : index
      %c0_17 = arith.constant 0 : index
      %28 = vector.load %arg10[%c0_15, %c0_16, %c0_17] : memref<2x128x128xf32, #tpu.memory_space<vmem>>, vector<1x128x128xf32>
      %29 = vector.shape_cast %28 : vector<1x128x128xf32> to vector<128x128xf32>
      %30 = vector.shape_cast %27 : vector<128x128xf32> to vector<1x128x128xf32>
      tpu.vector_store %arg10[%c0_15, %c0_16, %c0_17], %30 {strides = array<i32>} : memref<2x128x128xf32, #tpu.memory_space<vmem>>, vector<1x128x128xf32>,
    } else {
    }
    %c2_i32 = arith.constant 2 : i32
    %7 = arith.remsi %arg0, %c2_i32 : i32
    %c1_i32 = arith.constant 1 : i32
    %8 = arith.subi %c1_i32, %7 : i32
    %c0_i32_3 = arith.constant 0 : i32
    %9 = arith.cmpi eq, %arg2, %c0_i32_3 : i32
    %10 = arith.extui %9 : i1 to i32
    %c0_i32_4 = arith.constant 0 : i32
    %11 = arith.cmpi ne, %10, %c0_i32_4 : i32
    scf.if %11 {
      %cst_13 = arith.constant 0.000000e+00 : f32
      %27 = vector.broadcast %cst_13 : f32 to vector<128x128xf32>
      %c0_14 = arith.constant 0 : index
      %c0_15 = arith.constant 0 : index
      %28 = vector.load %arg11[%c0_14, %c0_15] : memref<128x128xf32, #tpu.memory_space<vmem>>, vector<128x128xf32>
      tpu.vector_store %arg11[%c0_14, %c0_15], %27 {strides = array<i32>} : memref<128x128xf32, #tpu.memory_space<vmem>>, vector<128x128xf32>,
    } else {
    }
    %c0 = arith.constant 0 : index
    %c0_5 = arith.constant 0 : index
    %12 = vector.load %arg3[%c0, %c0_5] : memref<128x128xbf16, #tpu.memory_space<vmem>>, vector<128x128xbf16>
    %13 = arith.extf %12 : vector<128x128xbf16> to vector<128x128xf32>
    %c128_i32 = arith.constant 128 : i32
    %14 = arith.muli %arg2, %c128_i32 : i32
    %15 = tpu.assume_multiple %14, 128 : i32
    %16 = arith.index_cast %7 : i32 to index
    %17 = arith.index_cast %15 : i32 to index
    %c0_6 = arith.constant 0 : index
    %18 = vector.load %arg10[%16, %17, %c0_6] : memref<2x128x128xf32, #tpu.memory_space<vmem>>, vector<1x128x128xf32>
    %19 = vector.shape_cast %18 : vector<1x128x128xf32> to vector<128x128xf32>
    %c0_7 = arith.constant 0 : index
    %c0_8 = arith.constant 0 : index
    %20 = vector.load %arg11[%c0_7, %c0_8] : memref<128x128xf32, #tpu.memory_space<vmem>>, vector<128x128xf32>
    %cst = arith.constant dense<0.000000e+00> : vector<128x128xf32>
    %21 = tpu.matmul %13, %19, %cst {dimension_numbers = #tpu.dot_dimension_numbers<[1], [0], [0], [1], [0, 0, 1, 1], [], []>} : vector<128x128xf32>, vector<128x128xf32>, vector<128x128xf32> -> vector<128x128xf32>
    %22 = arith.addf %20, %21 : vector<128x128xf32>
    %c0_9 = arith.constant 0 : index
    %c0_10 = arith.constant 0 : index
    %23 = vector.load %arg11[%c0_9, %c0_10] : memref<128x128xf32, #tpu.memory_space<vmem>>, vector<128x128xf32>
    tpu.vector_store %arg11[%c0_9, %c0_10], %22 {strides = array<i32>} : memref<128x128xf32, #tpu.memory_space<vmem>>, vector<128x128xf32>,
    %c0_i32_11 = arith.constant 0 : i32
    %24 = arith.cmpi eq, %arg2, %c0_i32_11 : i32
    %25 = arith.extui %24 : i1 to i32
    %c0_i32_12 = arith.constant 0 : i32
    %26 = arith.cmpi ne, %25, %c0_i32_12 : i32
    scf.if %26 {
      %c128_i32_13 = arith.constant 128 : i32
      %27 = arith.muli %arg1, %c128_i32_13 : i32
      %28 = tpu.assume_multiple %27, 128 : i32
      %29 = arith.index_cast %7 : i32 to index
      %30 = arith.index_cast %28 : i32 to index
      %c0_14 = arith.constant 0 : index
      %31 = vector.load %arg10[%29, %30, %c0_14] : memref<2x128x128xf32, #tpu.memory_space<vmem>>, vector<1x128x128xf32>
      %32 = vector.shape_cast %31 : vector<1x128x128xf32> to vector<128x128xf32>
      %c0_15 = arith.constant 0 : index
      %c0_16 = arith.constant 0 : index
      %33 = vector.load %arg11[%c0_15, %c0_16] : memref<128x128xf32, #tpu.memory_space<vmem>>, vector<128x128xf32>
      %34 = arith.addf %33, %32 : vector<128x128xf32>
      %c0_17 = arith.constant 0 : index
      %c0_18 = arith.constant 0 : index
      %c0_19 = arith.constant 0 : index
      %35 = vector.load %arg5[%c0_17, %c0_18, %c0_19] : memref<1x128x128xf32, #tpu.memory_space<vmem>>, vector<1x128x128xf32>
      %36 = vector.shape_cast %35 : vector<1x128x128xf32> to vector<128x128xf32>
      %cst_20 = arith.constant dense<0.000000e+00> : vector<128x128xf32>
      %37 = tpu.matmul %34, %36, %cst_20 {dimension_numbers = #tpu.dot_dimension_numbers<[1], [0], [0], [1], [0, 0, 1, 1], [], []>} : vector<128x128xf32>, vector<128x128xf32>, vector<128x128xf32> -> vector<128x128xf32>
      %c0_21 = arith.constant 0 : index
      %c0_22 = arith.constant 0 : index
      %c0_23 = arith.constant 0 : index
      %38 = vector.load %arg6[%c0_21, %c0_22, %c0_23] : memref<1x1x128xf32, #tpu.memory_space<vmem>>, vector<1x1x128xf32>
      %39 = vector.shape_cast %38 : vector<1x1x128xf32> to vector<1x128xf32>
      %40 = vector.broadcast %39 : vector<1x128xf32> to vector<128x128xf32>
      %41 = arith.addf %37, %40 : vector<128x128xf32>
      %cst_24 = arith.constant 0.000000e+00 : f32
      %42 = vector.broadcast %cst_24 : f32 to vector<128x128xf32>
      %43 = arith.maximumf %41, %42 : vector<128x128xf32>
      %c0_25 = arith.constant 0 : index
      %c0_26 = arith.constant 0 : index
      %c0_27 = arith.constant 0 : index
      %44 = vector.load %arg7[%c0_25, %c0_26, %c0_27] : memref<1x128x128xf32, #tpu.memory_space<vmem>>, vector<1x128x128xf32>
      %45 = vector.shape_cast %44 : vector<1x128x128xf32> to vector<128x128xf32>
      %cst_28 = arith.constant dense<0.000000e+00> : vector<128x128xf32>
      %46 = tpu.matmul %43, %45, %cst_28 {dimension_numbers = #tpu.dot_dimension_numbers<[1], [0], [0], [1], [0, 0, 1, 1], [], []>} : vector<128x128xf32>, vector<128x128xf32>, vector<128x128xf32> -> vector<128x128xf32>
      %c0_29 = arith.constant 0 : index
      %c0_30 = arith.constant 0 : index
      %c0_31 = arith.constant 0 : index
      %47 = vector.load %arg8[%c0_29, %c0_30, %c0_31] : memref<1x1x128xf32, #tpu.memory_space<vmem>>, vector<1x1x128xf32>
      %48 = vector.shape_cast %47 : vector<1x1x128xf32> to vector<1x128xf32>
      %49 = vector.broadcast %48 : vector<1x128xf32> to vector<128x128xf32>
      %50 = arith.addf %46, %49 : vector<128x128xf32>
      %cst_32 = arith.constant 0.000000e+00 : f32
      %51 = vector.broadcast %cst_32 : f32 to vector<128x128xf32>
      %52 = arith.maximumf %50, %51 : vector<128x128xf32>
      %53 = arith.index_cast %8 : i32 to index
      %54 = arith.index_cast %28 : i32 to index
      %c0_33 = arith.constant 0 : index
      %55 = vector.load %arg10[%53, %54, %c0_33] : memref<2x128x128xf32, #tpu.memory_space<vmem>>, vector<1x128x128xf32>
      %56 = vector.shape_cast %55 : vector<1x128x128xf32> to vector<128x128xf32>
      %57 = vector.shape_cast %52 : vector<128x128xf32> to vector<1x128x128xf32>
      tpu.vector_store %arg10[%53, %54, %c0_33], %57 {strides = array<i32>} : memref<2x128x128xf32, #tpu.memory_space<vmem>>, vector<1x128x128xf32>,
      %c0_34 = arith.constant 0 : index
      %c0_35 = arith.constant 0 : index
      %58 = vector.load %arg9[%c0_34, %c0_35] : memref<128x128xf32, #tpu.memory_space<vmem>>, vector<128x128xf32>
      tpu.vector_store %arg9[%c0_34, %c0_35], %50 {strides = array<i32>} : memref<128x128xf32, #tpu.memory_space<vmem>>, vector<128x128xf32>,
    } else {
    }
    return
  }
  func.func @transform_0(%arg0: i32, %arg1: i32, %arg2: i32) -> (i32, i32) {
    %c0_i32 = arith.constant 0 : i32
    return %arg1, %arg2 : i32, i32
  }
  func.func @transform_1(%arg0: i32, %arg1: i32, %arg2: i32) -> (i32, i32) {
    %c0_i32 = arith.constant 0 : i32
    %c0_i32_0 = arith.constant 0 : i32
    %c0_i32_1 = arith.constant 0 : i32
    return %c0_i32, %c0_i32_0 : i32, i32
  }
  func.func @transform_2(%arg0: i32, %arg1: i32, %arg2: i32) -> (i32, i32, i32) {
    %c0_i32 = arith.constant 0 : i32
    %c0_i32_0 = arith.constant 0 : i32
    %c0_i32_1 = arith.constant 0 : i32
    return %arg0, %c0_i32, %c0_i32_0 : i32, i32, i32
  }
  func.func @transform_3(%arg0: i32, %arg1: i32, %arg2: i32) -> (i32, i32, i32) {
    %c0_i32 = arith.constant 0 : i32
    %c0_i32_0 = arith.constant 0 : i32
    %c0_i32_1 = arith.constant 0 : i32
    return %arg0, %c0_i32, %c0_i32_0 : i32, i32, i32
  }
  func.func @transform_4(%arg0: i32, %arg1: i32, %arg2: i32) -> (i32, i32, i32) {
    %c0_i32 = arith.constant 0 : i32
    %c0_i32_0 = arith.constant 0 : i32
    %c0_i32_1 = arith.constant 0 : i32
    return %arg0, %c0_i32, %c0_i32_0 : i32, i32, i32
  }
  func.func @transform_5(%arg0: i32, %arg1: i32, %arg2: i32) -> (i32, i32, i32) {
    %c0_i32 = arith.constant 0 : i32
    %c0_i32_0 = arith.constant 0 : i32
    %c0_i32_1 = arith.constant 0 : i32
    return %arg0, %c0_i32, %c0_i32_0 : i32, i32, i32
  }
  func.func @transform_6(%arg0: i32, %arg1: i32, %arg2: i32) -> (i32, i32) {
    %c0_i32 = arith.constant 0 : i32
    %c0_i32_0 = arith.constant 0 : i32
    return %arg1, %c0_i32 : i32, i32
  }
}

</mosaic_0001>

<llo_original>
// kernel: tpu_custom_call.1
$region0: #{tpu_custom_call.1}
  #allocation0 [shape = 'u32[]', space=smem, size = 0x4, offset = 0x4, fixed_abs, tag = 'smem constant byte address 0x4 - core index']
  #allocation1 [shape = 'u32[144,128]{1,0:T(1,128)}', space=vmem, size = 0x12000, scoped, tag = 'internal scratch']
  #allocation2 [shape = 'f32[2,128,128]{2,1,0:T(8,128)}', space=vmem, size = 0x20000, scoped, tag = 'scratch operand']
  #allocation3 [shape = 'f32[128,128]{1,0:T(8,128)}', space=vmem, size = 0x10000, scoped, tag = 'scratch operand']
  %s0 = inlined_call_operand.hbm [shape: bf16[128,128], index: 0, kind: input, shape index: {}]
  %s1 = inlined_call_operand.hbm [shape: f32[128,128], index: 1, kind: input, shape index: {}]
  %s2 = inlined_call_operand.hbm [shape: f32[3,128,128], index: 2, kind: input, shape index: {}]
  %s3 = inlined_call_operand.vmem [shape: f32[3,1,128], index: 3, kind: input, shape index: {}]
  %s4 = inlined_call_operand.hbm [shape: f32[3,128,128], index: 4, kind: input, shape index: {}]
  %s5 = inlined_call_operand.vmem [shape: f32[3,1,128], index: 5, kind: input, shape index: {}]
  %s6 = inlined_call_operand.hbm [shape: f32[128,128], index: 6, kind: output, shape index: {}]
  %s7 = sld [smem:[#allocation0]]
  $region85: #{tpu_custom_call.1} parent=0
    _
  %s9 = ssub.s32 1, %s7
  %s10 = scalar_select 0, %s9, %s7
  $region1: #{tpu_custom_call.1} parent=0
    #allocation4 [shape = 'u8[32768]{0}', space=vmem, size = 0x8000, scoped, tag = 'input window, operand 0, single buffered']
    #allocation5 [shape = 's32[2]{0}', space=sflag, size = 0x8, scoped, tag = 'scoped memory for tpu_custom_call.1']
    #allocation6 [shape = 's32[2]{0}', space=sflag, size = 0x8, scoped, tag = 'scoped memory for tpu_custom_call.1']
    #allocation7 [shape = 'u8[65536]{0}', space=vmem, size = 0x10000, scoped, tag = 'input window, operand 1, single buffered']
    #allocation8 [shape = 's32[1]{0}', space=sflag, size = 0x4, scoped, tag = 'scoped memory for tpu_custom_call.1']
    #allocation9 [shape = 'u8[131072]{0}', space=vmem, size = 0x20000, scoped, tag = 'input window, operand 2']
    #allocation10 [shape = 'u8[131072]{0}', space=vmem, size = 0x20000, scoped, tag = 'input window, operand 4']
    #allocation11 [shape = 'u8[65536]{0}', space=vmem, size = 0x10000, scoped, tag = 'output window, operand 0, single buffered']
    %11 = vsyncpa [#allocation5], 0
    %12 = vsyncpa [#allocation8], 0
    %13 = vsyncpa [#allocation6], 0
    loop: start=0, step=1, limit=5
    $region2: #{tpu_custom_call.1} parent=1 // loop_pre_header
      _
    $region3: #{tpu_custom_call.1} parent=1 // loop_header
      %s15 = sphi 0, %s19
      %p16 = scmp.ge.s32.totalorder %s15, 5
      %s22 = sphi 0, %s41
      %s23 = sphi 0, %s37
      %s24 = sphi 0, %s33
      %s25 = sphi 0, %s22
      %s26 = sphi 0, %s23
      %s27 = sphi 0, %s24
      %s28 = sphi 0, %s25
      %s29 = sphi 0, %s26
      %s30 = sphi 0, %s27
      %s46 = sphi 0, %s48
      %s49 = sphi 0, %s46
      %s50 = sphi 0, %s49
      %s66 = sphi 0, %s50
      %s70 = sphi 0, %s70
      %s72 = sphi 0, %s70
      %s73 = sphi 0, %s72
      %s87 = sphi 0, %s73
      %s93 = sphi 0, %s95
      %s96 = sphi 0, %s93
      %s97 = sphi 0, %s96
      %s113 = sphi 0, %s97
      %s119 = sphi 0, %s121
      %s122 = sphi 0, %s119
      %s123 = sphi 0, %s122
      %s139 = sphi 0, %s123
      %s145 = sphi 0, %s147
      %s148 = sphi 0, %s145
      %s149 = sphi 0, %s148
      %s165 = sphi 0, %s149
      %s171 = sphi 0, %s173
      %s174 = sphi 0, %s171
      %s175 = sphi 0, %s174
      %s191 = sphi 0, %s175
      %s197 = sphi 0, %s199
      %s200 = sphi 0, %s197
      %s201 = sphi 0, %s200
      %s217 = sphi 0, %s201
    $region4: #{tpu_custom_call.1} parent=1 // loop_header_branch
      %18 = sbr.rel (%p16) target = $region8
    $region5: #{tpu_custom_call.1} parent=1 // loop_body
      %s20 = ssub.s32 %s15, 1
      %s21 = ssub.s32 %s15, 2
      %s31 = sadd.s32 1, %s24
      %p32 = scmp.ge.s32.totalorder %s31, 1
      %s33 = scalar_select %p32, 0, %s31
      %s34 = sadd.s32 1, %s23
      %s35 = scalar_select %p32, %s34, %s23
      %p36 = scmp.ge.s32.totalorder %s35, 1
      %s37 = scalar_select %p36, 0, %s35
      %s38 = sadd.s32 1, %s22
      %s39 = scalar_select %p36, %s38, %s22
      %p40 = scmp.ge.s32.totalorder %s39, 3
      %s41 = scalar_select %p40, 0, %s39
      %s42 = ssub.s32 %s23, %s37
      %s43 = ssub.s32 %s24, %s33
      %s44 = sor.u32 %s42, %s43
      %p45 = scmp.eq.s32.totalorder %s44, 0
      %s47 = sadd.s32 %s46, 1
      %s48 = scalar_select %p45, %s46, %s47
      %p51 = pneg %p45
      %p52 = scmp.eq.s32.totalorder %s15, 2
      %p53 = por %p51, %p52
      %p54 = scmp.ne.s32.totalorder %s46, %s49
      %p55 = scmp.eq.s32.totalorder %s15, 0
      %p56 = por %p54, %p55
      %p57 = scmp.ne.s32.totalorder %s46, %s49
      %p58 = scmp.eq.s32.totalorder %s20, 2
      %p59 = por %p57, %p58
      %p60 = scmp.ne.s32.totalorder %s49, %s50
      %p61 = scmp.eq.s32.totalorder %s20, 0
      %p62 = por %p60, %p61
      %p63 = scmp.ne.s32.totalorder %s49, %s50
      %p64 = scmp.eq.s32.totalorder %s21, 2
      %p65 = por %p63, %p64
      %p67 = scmp.ne.s32.totalorder %s50, %s66
      %p68 = scmp.eq.s32.totalorder %s21, 0
      %p69 = por %p67, %p68
      %s71 = sadd.s32 %s70, 1
      %p74 = scmp.eq.s32.totalorder %s15, 2
      %p75 = scmp.ne.s32.totalorder %s70, %s72
      %p76 = scmp.eq.s32.totalorder %s15, 0
      %p77 = por %p75, %p76
      %p78 = scmp.ne.s32.totalorder %s70, %s72
      %p79 = scmp.eq.s32.totalorder %s20, 2
      %p80 = por %p78, %p79
      %p81 = scmp.ne.s32.totalorder %s72, %s73
      %p82 = scmp.eq.s32.totalorder %s20, 0
      %p83 = por %p81, %p82
      %p84 = scmp.ne.s32.totalorder %s72, %s73
      %p85 = scmp.eq.s32.totalorder %s21, 2
      %p86 = por %p84, %p85
      %p88 = scmp.ne.s32.totalorder %s73, %s87
      %p89 = scmp.eq.s32.totalorder %s21, 0
      %p90 = por %p88, %p89
      %s91 = ssub.s32 %s22, %s41
      %p92 = scmp.eq.s32.totalorder %s91, 0
      %s94 = sadd.s32 %s93, 1
      %s95 = scalar_select %p92, %s93, %s94
      %p98 = pneg %p92
      %p99 = scmp.eq.s32.totalorder %s15, 2
      %p100 = por %p98, %p99
      %p101 = scmp.ne.s32.totalorder %s93, %s96
      %p102 = scmp.eq.s32.totalorder %s15, 0
      %p103 = por %p101, %p102
      %p104 = scmp.ne.s32.totalorder %s93, %s96
      %p105 = scmp.eq.s32.totalorder %s20, 2
      %p106 = por %p104, %p105
      %p107 = scmp.ne.s32.totalorder %s96, %s97
      %p108 = scmp.eq.s32.totalorder %s20, 0
      %p109 = por %p107, %p108
      %p110 = scmp.ne.s32.totalorder %s96, %s97
      %p111 = scmp.eq.s32.totalorder %s21, 2
      %p112 = por %p110, %p111
      %p114 = scmp.ne.s32.totalorder %s97, %s113
      %p115 = scmp.eq.s32.totalorder %s21, 0
      %p116 = por %p114, %p115
      %s117 = ssub.s32 %s22, %s41
      %p118 = scmp.eq.s32.totalorder %s117, 0
      %s120 = sadd.s32 %s119, 1
      %s121 = scalar_select %p118, %s119, %s120
      %p124 = pneg %p118
      %p125 = scmp.eq.s32.totalorder %s15, 2
      %p126 = por %p124, %p125
      %p127 = scmp.ne.s32.totalorder %s119, %s122
      %p128 = scmp.eq.s32.totalorder %s15, 0
      %p129 = por %p127, %p128
      %p130 = scmp.ne.s32.totalorder %s119, %s122
      %p131 = scmp.eq.s32.totalorder %s20, 2
      %p132 = por %p130, %p131
      %p133 = scmp.ne.s32.totalorder %s122, %s123
      %p134 = scmp.eq.s32.totalorder %s20, 0
      %p135 = por %p133, %p134
      %p136 = scmp.ne.s32.totalorder %s122, %s123
      %p137 = scmp.eq.s32.totalorder %s21, 2
      %p138 = por %p136, %p137
      %p140 = scmp.ne.s32.totalorder %s123, %s139
      %p141 = scmp.eq.s32.totalorder %s21, 0
      %p142 = por %p140, %p141
      %s143 = ssub.s32 %s22, %s41
      %p144 = scmp.eq.s32.totalorder %s143, 0
      %s146 = sadd.s32 %s145, 1
      %s147 = scalar_select %p144, %s145, %s146
      %p150 = pneg %p144
      %p151 = scmp.eq.s32.totalorder %s15, 2
      %p152 = por %p150, %p151
      %p153 = scmp.ne.s32.totalorder %s145, %s148
      %p154 = scmp.eq.s32.totalorder %s15, 0
      %p155 = por %p153, %p154
      %p156 = scmp.ne.s32.totalorder %s145, %s148
      %p157 = scmp.eq.s32.totalorder %s20, 2
      %p158 = por %p156, %p157
      %p159 = scmp.ne.s32.totalorder %s148, %s149
      %p160 = scmp.eq.s32.totalorder %s20, 0
      %p161 = por %p159, %p160
      %p162 = scmp.ne.s32.totalorder %s148, %s149
      %p163 = scmp.eq.s32.totalorder %s21, 2
      %p164 = por %p162, %p163
      %p166 = scmp.ne.s32.totalorder %s149, %s165
      %p167 = scmp.eq.s32.totalorder %s21, 0
      %p168 = por %p166, %p167
      %s169 = ssub.s32 %s22, %s41
      %p170 = scmp.eq.s32.totalorder %s169, 0
      %s172 = sadd.s32 %s171, 1
      %s173 = scalar_select %p170, %s171, %s172
      %p176 = pneg %p170
      %p177 = scmp.eq.s32.totalorder %s15, 2
      %p178 = por %p176, %p177
      %p179 = scmp.ne.s32.totalorder %s171, %s174
      %p180 = scmp.eq.s32.totalorder %s15, 0
      %p181 = por %p179, %p180
      %p182 = scmp.ne.s32.totalorder %s171, %s174
      %p183 = scmp.eq.s32.totalorder %s20, 2
      %p184 = por %p182, %p183
      %p185 = scmp.ne.s32.totalorder %s174, %s175
      %p186 = scmp.eq.s32.totalorder %s20, 0
      %p187 = por %p185, %p186
      %p188 = scmp.ne.s32.totalorder %s174, %s175
      %p189 = scmp.eq.s32.totalorder %s21, 2
      %p190 = por %p188, %p189
      %p192 = scmp.ne.s32.totalorder %s175, %s191
      %p193 = scmp.eq.s32.totalorder %s21, 0
      %p194 = por %p192, %p193
      %s195 = ssub.s32 %s23, %s37
      %p196 = scmp.eq.s32.totalorder %s195, 0
      %s198 = sadd.s32 %s197, 1
      %s199 = scalar_select %p196, %s197, %s198
      %p202 = pneg %p196
      %p203 = scmp.eq.s32.totalorder %s15, 2
      %p204 = por %p202, %p203
      %p205 = scmp.ne.s32.totalorder %s197, %s200
      %p206 = scmp.eq.s32.totalorder %s15, 0
      %p207 = por %p205, %p206
      %p208 = scmp.ne.s32.totalorder %s197, %s200
      %p209 = scmp.eq.s32.totalorder %s20, 2
      %p210 = por %p208, %p209
      %p211 = scmp.ne.s32.totalorder %s200, %s201
      %p212 = scmp.eq.s32.totalorder %s20, 0
      %p213 = por %p211, %p212
      %p214 = scmp.ne.s32.totalorder %s200, %s201
      %p215 = scmp.eq.s32.totalorder %s21, 2
      %p216 = por %p214, %p215
      %p218 = scmp.ne.s32.totalorder %s201, %s217
      %p219 = scmp.eq.s32.totalorder %s21, 0
      %p220 = por %p218, %p219
      %p221 = scmp.le.s32.totalorder 1, %s15
      %p222 = scmp.lt.s32.totalorder %s15, 4
      %p223 = pnand %p221, %p222
      %p224 = pneg %p223
      // Predicated region
      $region9: #{tpu_custom_call.1} parent=5 // pred_check
        _
      $region10: #{tpu_custom_call.1} parent=5 // pred_check_branch
        %226 = sbr.rel (%p223) target = $region12
      $region11: #{tpu_custom_call.1} parent=5 // pred_region
        %s227 = ssub.s32 %s15, 1
        // Predicated region
        $region13: #{tpu_custom_call.1} parent=11 // pred_check
          %p228 = pneg %p62
        $region14: #{tpu_custom_call.1} parent=11 // pred_check_branch
          %230 = sbr.rel (%p228) target = $region16
        $region15: #{tpu_custom_call.1} parent=11 // pred_region
          %s231 = smul.u32 16, %s26
          %s233 = ssub.s32 1024, 1024
          %234 = vsyncadd [#allocation5], %s233
          %s235 = sadd.s32 %s27, %s231
          %s236 = smul.addr %s235, 64
          %s237 = scalar_lea.hbm %s0, %s236
          %s238 = sshll.u32 [#allocation4], 4
          %s239 = int_to_ptr.vmem [resolvable:$true] %s238
          %244 = dma.hbm_to_vmem [thread:$0]  %s237, 1024, %s239, [#allocation5], 64, 64, 4
        $region16: #{tpu_custom_call.1} parent=11 // pred_fallthru
          _
        // Predicated region
        $region17: #{tpu_custom_call.1} parent=11 // pred_check
          %p245 = pneg %p83
        $region18: #{tpu_custom_call.1} parent=11 // pred_check_branch
          %247 = sbr.rel (%p245) target = $region20
        $region19: #{tpu_custom_call.1} parent=11 // pred_region
          %s249 = ssub.s32 2048, 2048
          %250 = vsyncadd [#allocation8], %s249
          %s251 = sshll.u32 [#allocation7], 4
          %s252 = int_to_ptr.vmem [resolvable:$true] %s251
          %257 = dma.hbm_to_vmem [thread:$0]  %s1, 2048, %s252, [#allocation8], 128, 128, 8
        $region20: #{tpu_custom_call.1} parent=11 // pred_fallthru
          _
      $region12: #{tpu_custom_call.1} parent=5 // pred_fallthru
        _
      %p258 = scmp.lt.s32.totalorder %s15, 3
      // Predicated region
      $region21: #{tpu_custom_call.1} parent=5 // pred_check
        %p259 = pneg %p258
      $region22: #{tpu_custom_call.1} parent=5 // pred_check_branch
        %261 = sbr.rel (%p259) target = $region24
      $region23: #{tpu_custom_call.1} parent=5 // pred_region
        // Predicated region
        $region25: #{tpu_custom_call.1} parent=23 // pred_check
          %p262 = pneg %p103
        $region26: #{tpu_custom_call.1} parent=23 // pred_check_branch
          %264 = sbr.rel (%p262) target = $region28
        $region27: #{tpu_custom_call.1} parent=23 // pred_region
          %s265 = sand.u32 %s15, 1
          %s266 = scalar_lea.sflag [#allocation5], %s265
          %s267 = sand.u32 %s93, 1
          %s268 = smul.addr %s267, 128
          %s269 = scalar_lea.vmem [#allocation9], %s268
          %s271 = ssub.s32 2048, 2048
          %272 = vsyncadd %s266, %s271
          %s273 = smul.addr %s22, 16
          %s274 = smul.addr %s273, 128
          %s275 = scalar_lea.hbm %s2, %s274
          %s276 = sshll.u32 %s269, 4
          %s277 = int_to_ptr.vmem [resolvable:$true] %s276
          %282 = dma.hbm_to_vmem [thread:$0]  %s275, 2048, %s277, %s266, 128, 128, 8
        $region28: #{tpu_custom_call.1} parent=23 // pred_fallthru
          _
        // Predicated region
        $region29: #{tpu_custom_call.1} parent=23 // pred_check
          %p283 = pneg %p129
        $region30: #{tpu_custom_call.1} parent=23 // pred_check_branch
          %285 = sbr.rel (%p283) target = $region32
        $region31: #{tpu_custom_call.1} parent=23 // pred_region
          %p286 = scmp.lt.s32.totalorder %s22, 2
          %s287 = scalar_select %p286, %s22, 2
          %s288 = scalar_lea.vmem %s3, %s287
        $region32: #{tpu_custom_call.1} parent=23 // pred_fallthru
          _
        // Predicated region
        $region33: #{tpu_custom_call.1} parent=23 // pred_check
          %p289 = pneg %p155
        $region34: #{tpu_custom_call.1} parent=23 // pred_check_branch
          %291 = sbr.rel (%p289) target = $region36
        $region35: #{tpu_custom_call.1} parent=23 // pred_region
          %s292 = sand.u32 %s15, 1
          %s293 = scalar_lea.sflag [#allocation5], %s292
          %s294 = sand.u32 %s145, 1
          %s295 = smul.addr %s294, 128
          %s296 = scalar_lea.vmem [#allocation10], %s295
          %s298 = ssub.s32 2048, 2048
          %299 = vsyncadd %s293, %s298
          %s300 = smul.addr %s22, 16
          %s301 = smul.addr %s300, 128
          %s302 = scalar_lea.hbm %s4, %s301
          %s303 = sshll.u32 %s296, 4
          %s304 = int_to_ptr.vmem [resolvable:$true] %s303
          %309 = dma.hbm_to_vmem [thread:$0]  %s302, 2048, %s304, %s293, 128, 128, 8
        $region36: #{tpu_custom_call.1} parent=23 // pred_fallthru
          _
        // Predicated region
        $region37: #{tpu_custom_call.1} parent=23 // pred_check
          %p310 = pneg %p181
        $region38: #{tpu_custom_call.1} parent=23 // pred_check_branch
          %312 = sbr.rel (%p310) target = $region40
        $region39: #{tpu_custom_call.1} parent=23 // pred_region
          %p313 = scmp.lt.s32.totalorder %s22, 2
          %s314 = scalar_select %p313, %s22, 2
          %s315 = scalar_lea.vmem %s5, %s314
        $region40: #{tpu_custom_call.1} parent=23 // pred_fallthru
          _
      $region24: #{tpu_custom_call.1} parent=5 // pred_fallthru
        _
      %p316 = scmp.le.s32.totalorder 1, %s15
      %p317 = scmp.lt.s32.totalorder %s15, 4
      %p318 = pnand %p316, %p317
      %p319 = pneg %p318
      // Predicated region
      $region41: #{tpu_custom_call.1} parent=5 // pred_check
        _
      $region42: #{tpu_custom_call.1} parent=5 // pred_check_branch
        %321 = sbr.rel (%p318) target = $region44
      $region43: #{tpu_custom_call.1} parent=5 // pred_region
        %s322 = ssub.s32 %s15, 1
        // Predicated region
        $region45: #{tpu_custom_call.1} parent=43 // pred_check
          %p323 = pneg %p62
        $region46: #{tpu_custom_call.1} parent=43 // pred_check_branch
          %325 = sbr.rel (%p323) target = $region48
        $region47: #{tpu_custom_call.1} parent=43 // pred_region
          %326 = dma.done [#allocation5], 1024
        $region48: #{tpu_custom_call.1} parent=43 // pred_fallthru
          _
        // Predicated region
        $region49: #{tpu_custom_call.1} parent=43 // pred_check
          %p327 = pneg %p83
        $region50: #{tpu_custom_call.1} parent=43 // pred_check_branch
          %329 = sbr.rel (%p327) target = $region52
        $region51: #{tpu_custom_call.1} parent=43 // pred_region
          %330 = dma.done [#allocation8], 2048
        $region52: #{tpu_custom_call.1} parent=43 // pred_fallthru
          _
        %s331 = sand.u32 %s20, 1
        %s332 = scalar_lea.sflag [#allocation5], %s331
        %s333 = sand.u32 %s96, 1
        %s334 = smul.addr %s333, 128
        %s335 = scalar_lea.vmem [#allocation9], %s334
        // Predicated region
        $region53: #{tpu_custom_call.1} parent=43 // pred_check
          %p336 = pneg %p109
        $region54: #{tpu_custom_call.1} parent=43 // pred_check_branch
          %338 = sbr.rel (%p336) target = $region56
        $region55: #{tpu_custom_call.1} parent=43 // pred_region
          %339 = dma.done %s332, 2048
        $region56: #{tpu_custom_call.1} parent=43 // pred_fallthru
          _
        %s340 = sand.u32 %s20, 1
        %s341 = scalar_lea.sflag [#allocation5], %s340
        %s342 = sand.u32 %s148, 1
        %s343 = smul.addr %s342, 128
        %s344 = scalar_lea.vmem [#allocation10], %s343
        // Predicated region
        $region57: #{tpu_custom_call.1} parent=43 // pred_check
          %p345 = pneg %p161
        $region58: #{tpu_custom_call.1} parent=43 // pred_check_branch
          %347 = sbr.rel (%p345) target = $region60
        $region59: #{tpu_custom_call.1} parent=43 // pred_region
          %348 = dma.done %s341, 2048
        $region60: #{tpu_custom_call.1} parent=43 // pred_fallthru
          _
        %p349 = pneg %p62
        %p350 = pneg %p59
        %p351 = pneg %p83
        %p352 = pneg %p80
        %s353 = sand.u32 %s20, 1
        %s354 = scalar_lea.sflag [#allocation5], %s353
        %s355 = sand.u32 %s96, 1
        %s356 = smul.addr %s355, 128
        %s357 = scalar_lea.vmem [#allocation9], %s356
        %p358 = pneg %p109
        %p359 = pneg %p106
        %p360 = scmp.lt.s32.totalorder %s25, 2
        %s361 = scalar_select %p360, %s25, 2
        %s362 = scalar_lea.vmem %s3, %s361
        %p363 = pneg %p135
        %p364 = pneg %p132
        %s365 = sand.u32 %s20, 1
        %s366 = scalar_lea.sflag [#allocation5], %s365
        %s367 = sand.u32 %s148, 1
        %s368 = smul.addr %s367, 128
        %s369 = scalar_lea.vmem [#allocation10], %s368
        %p370 = pneg %p161
        %p371 = pneg %p158
        %p372 = scmp.lt.s32.totalorder %s25, 2
        %s373 = scalar_select %p372, %s25, 2
        %s374 = scalar_lea.vmem %s5, %s373
        %p375 = pneg %p187
        %p376 = pneg %p184
        %p377 = pneg %p213
        %p378 = pneg %p210
        %s379 = smul.u32 16, %s26
        %p380 = scmp.lt.s32.totalorder %s25, 2
        %s381 = scalar_select %p380, %s25, 2
        %s382 = scalar_lea.vmem %s3, %s381
        %p383 = scmp.lt.s32.totalorder %s25, 2
        %s384 = scalar_select %p383, %s25, 2
        %s385 = scalar_lea.vmem %s5, %s384
        %s386 = smul.u32 16, %s26
        %p387 = scmp.eq.s32.totalorder %s25, 0
        %p388 = scmp.eq.s32.totalorder %s26, 0
        %p389 = pnand %p387, %p388
        %p390 = pneg %p389
        %p391 = scmp.eq.s32.totalorder %s27, 0
        %p392 = pnand %p390, %p391
        %p393 = pneg %p392
        // Predicated region
        $region61: #{tpu_custom_call.1} parent=43 // pred_check
          _
        $region62: #{tpu_custom_call.1} parent=43 // pred_check_branch
          %395 = sbr.rel (%p392) target = $region64
        $region63: #{tpu_custom_call.1} parent=43 // pred_region
          %v396 = vld [vmem:[#allocation7] sm:$0xff]
          %v397 = vld [vmem:[#allocation7 + $0x8] sm:$0xff]
          %v398 = vld [vmem:[#allocation7 + $0x10] sm:$0xff]
          %v399 = vld [vmem:[#allocation7 + $0x18] sm:$0xff]
          %v400 = vld [vmem:[#allocation7 + $0x20] sm:$0xff]
          %v401 = vld [vmem:[#allocation7 + $0x28] sm:$0xff]
          %v402 = vld [vmem:[#allocation7 + $0x30] sm:$0xff]
          %v403 = vld [vmem:[#allocation7 + $0x38] sm:$0xff]
          %v404 = vld [vmem:[#allocation7 + $0x40] sm:$0xff]
          %v405 = vld [vmem:[#allocation7 + $0x48] sm:$0xff]
          %v406 = vld [vmem:[#allocation7 + $0x50] sm:$0xff]
          %v407 = vld [vmem:[#allocation7 + $0x58] sm:$0xff]
          %v408 = vld [vmem:[#allocation7 + $0x60] sm:$0xff]
          %v409 = vld [vmem:[#allocation7 + $0x68] sm:$0xff]
          %v410 = vld [vmem:[#allocation7 + $0x70] sm:$0xff]
          %v411 = vld [vmem:[#allocation7 + $0x78] sm:$0xff]
          %412 = vst [vmem:[#allocation2] sm:$0xff] %v396
          %413 = vst [vmem:[#allocation2 + $0x8] sm:$0xff] %v397
          %414 = vst [vmem:[#allocation2 + $0x10] sm:$0xff] %v398
          %415 = vst [vmem:[#allocation2 + $0x18] sm:$0xff] %v399
          %416 = vst [vmem:[#allocation2 + $0x20] sm:$0xff] %v400
          %417 = vst [vmem:[#allocation2 + $0x28] sm:$0xff] %v401
          %418 = vst [vmem:[#allocation2 + $0x30] sm:$0xff] %v402
          %419 = vst [vmem:[#allocation2 + $0x38] sm:$0xff] %v403
          %420 = vst [vmem:[#allocation2 + $0x40] sm:$0xff] %v404
          %421 = vst [vmem:[#allocation2 + $0x48] sm:$0xff] %v405
          %422 = vst [vmem:[#allocation2 + $0x50] sm:$0xff] %v406
          %423 = vst [vmem:[#allocation2 + $0x58] sm:$0xff] %v407
          %424 = vst [vmem:[#allocation2 + $0x60] sm:$0xff] %v408
          %425 = vst [vmem:[#allocation2 + $0x68] sm:$0xff] %v409
          %426 = vst [vmem:[#allocation2 + $0x70] sm:$0xff] %v410
          %427 = vst [vmem:[#allocation2 + $0x78] sm:$0xff] %v411
        $region64: #{tpu_custom_call.1} parent=43 // pred_fallthru
          _
        %p428 = scmp.lt.s32.totalorder %s25, 0
        %s429 = ssub.s32 0, %s25
        %s430 = scalar_select %p428, %s429, %s25
        %s431 = sand.u32 %s430, 1
        %s432 = ssub.s32 0, %s431
        %s433 = scalar_select %p428, %s432, %s431
        %s434 = ssub.s32 1, %s433
        // Predicated region
        $region65: #{tpu_custom_call.1} parent=43 // pred_check
          %p435 = pneg %p391
        $region66: #{tpu_custom_call.1} parent=43 // pred_check_branch
          %437 = sbr.rel (%p435) target = $region68
        $region67: #{tpu_custom_call.1} parent=43 // pred_region
          %438 = vst [vmem:[#allocation3] sm:$0xff] 0.0
          %439 = vst [vmem:[#allocation3 + $0x8] sm:$0xff] 0.0
          %440 = vst [vmem:[#allocation3 + $0x10] sm:$0xff] 0.0
          %441 = vst [vmem:[#allocation3 + $0x18] sm:$0xff] 0.0
          %442 = vst [vmem:[#allocation3 + $0x20] sm:$0xff] 0.0
          %443 = vst [vmem:[#allocation3 + $0x28] sm:$0xff] 0.0
          %444 = vst [vmem:[#allocation3 + $0x30] sm:$0xff] 0.0
          %445 = vst [vmem:[#allocation3 + $0x38] sm:$0xff] 0.0
          %446 = vst [vmem:[#allocation3 + $0x40] sm:$0xff] 0.0
          %447 = vst [vmem:[#allocation3 + $0x48] sm:$0xff] 0.0
          %448 = vst [vmem:[#allocation3 + $0x50] sm:$0xff] 0.0
          %449 = vst [vmem:[#allocation3 + $0x58] sm:$0xff] 0.0
          %450 = vst [vmem:[#allocation3 + $0x60] sm:$0xff] 0.0
          %451 = vst [vmem:[#allocation3 + $0x68] sm:$0xff] 0.0
          %452 = vst [vmem:[#allocation3 + $0x70] sm:$0xff] 0.0
          %453 = vst [vmem:[#allocation3 + $0x78] sm:$0xff] 0.0
        $region68: #{tpu_custom_call.1} parent=43 // pred_fallthru
          _
        %v454 = vld [vmem:[#allocation4] sm:$0xf]
        %v455 = vld [vmem:[#allocation4 + $0x4] sm:$0xf]
        %v456 = vld [vmem:[#allocation4 + $0x8] sm:$0xf]
        %v457 = vld [vmem:[#allocation4 + $0xc] sm:$0xf]
        %v458 = vld [vmem:[#allocation4 + $0x10] sm:$0xf]
        %v459 = vld [vmem:[#allocation4 + $0x14] sm:$0xf]
        %v460 = vld [vmem:[#allocation4 + $0x18] sm:$0xf]
        %v461 = vld [vmem:[#allocation4 + $0x1c] sm:$0xf]
        %v462 = vld [vmem:[#allocation4 + $0x20] sm:$0xf]
        %v463 = vld [vmem:[#allocation4 + $0x24] sm:$0xf]
        %v464 = vld [vmem:[#allocation4 + $0x28] sm:$0xf]
        %v465 = vld [vmem:[#allocation4 + $0x2c] sm:$0xf]
        %v466 = vld [vmem:[#allocation4 + $0x30] sm:$0xf]
        %v467 = vld [vmem:[#allocation4 + $0x34] sm:$0xf]
        %v468 = vld [vmem:[#allocation4 + $0x38] sm:$0xf]
        %v469 = vld [vmem:[#allocation4 + $0x3c] sm:$0xf]
        %v470 = vunpack.c.l.bf16 %v454
        %v471 = vunpack.c.l.bf16 %v455
        %v472 = vunpack.c.l.bf16 %v456
        %v473 = vunpack.c.l.bf16 %v457
        %v474 = vunpack.c.l.bf16 %v458
        %v475 = vunpack.c.l.bf16 %v459
        %v476 = vunpack.c.l.bf16 %v460
        %v477 = vunpack.c.l.bf16 %v461
        %v478 = vunpack.c.l.bf16 %v462
        %v479 = vunpack.c.l.bf16 %v463
        %v480 = vunpack.c.l.bf16 %v464
        %v481 = vunpack.c.l.bf16 %v465
        %v482 = vunpack.c.l.bf16 %v466
        %v483 = vunpack.c.l.bf16 %v467
        %v484 = vunpack.c.l.bf16 %v468
        %v485 = vunpack.c.l.bf16 %v469
        %s486 = smul.u32 %s27, 128
        %s487 = smul.u32 %s433, 128
        %s488 = sadd.s32 %s486, %s487
        %s489 = scalar_lea.vmem [#allocation2], %s488
        %v490 = vld [vmem:[%s489] sm:$0xff]
        %v491 = vld [vmem:[%s489 + $0x8] sm:$0xff]
        %v492 = vld [vmem:[%s489 + $0x10] sm:$0xff]
        %v493 = vld [vmem:[%s489 + $0x18] sm:$0xff]
        %v494 = vld [vmem:[%s489 + $0x20] sm:$0xff]
        %v495 = vld [vmem:[%s489 + $0x28] sm:$0xff]
        %v496 = vld [vmem:[%s489 + $0x30] sm:$0xff]
        %v497 = vld [vmem:[%s489 + $0x38] sm:$0xff]
        %v498 = vld [vmem:[%s489 + $0x40] sm:$0xff]
        %v499 = vld [vmem:[%s489 + $0x48] sm:$0xff]
        %v500 = vld [vmem:[%s489 + $0x50] sm:$0xff]
        %v501 = vld [vmem:[%s489 + $0x58] sm:$0xff]
        %v502 = vld [vmem:[%s489 + $0x60] sm:$0xff]
        %v503 = vld [vmem:[%s489 + $0x68] sm:$0xff]
        %v504 = vld [vmem:[%s489 + $0x70] sm:$0xff]
        %v505 = vld [vmem:[%s489 + $0x78] sm:$0xff]
        %v506 = vld [vmem:[#allocation3] sm:$0xff]
        %v507 = vld [vmem:[#allocation3 + $0x8] sm:$0xff]
        %v508 = vld [vmem:[#allocation3 + $0x10] sm:$0xff]
        %v509 = vld [vmem:[#allocation3 + $0x18] sm:$0xff]
        %v510 = vld [vmem:[#allocation3 + $0x20] sm:$0xff]
        %v511 = vld [vmem:[#allocation3 + $0x28] sm:$0xff]
        %v512 = vld [vmem:[#allocation3 + $0x30] sm:$0xff]
        %v513 = vld [vmem:[#allocation3 + $0x38] sm:$0xff]
        %v514 = vld [vmem:[#allocation3 + $0x40] sm:$0xff]
        %v515 = vld [vmem:[#allocation3 + $0x48] sm:$0xff]
        %v516 = vld [vmem:[#allocation3 + $0x50] sm:$0xff]
        %v517 = vld [vmem:[#allocation3 + $0x58] sm:$0xff]
        %v518 = vld [vmem:[#allocation3 + $0x60] sm:$0xff]
        %v519 = vld [vmem:[#allocation3 + $0x68] sm:$0xff]
        %v520 = vld [vmem:[#allocation3 + $0x70] sm:$0xff]
        %v521 = vld [vmem:[#allocation3 + $0x78] sm:$0xff]
        %522 = vmatprep.subr.mxu0 0.0
        %523 = vmatpush1.msra.mxu0 %v490
        %524 = vmatprep.subr.mxu0 0.0
        %525 = vmatpush1.msra.mxu0 %v491
        %526 = vmatprep.subr.mxu0 0.0
        %527 = vmatpush1.msra.mxu0 %v492
        %528 = vmatprep.subr.mxu0 0.0
        %529 = vmatpush1.msra.mxu0 %v493
        %530 = vmatprep.subr.mxu0 0.0
        %531 = vmatpush1.msra.mxu0 %v494
        %532 = vmatprep.subr.mxu0 0.0
        %533 = vmatpush1.msra.mxu0 %v495
        %534 = vmatprep.subr.mxu0 0.0
        %535 = vmatpush1.msra.mxu0 %v496
        %536 = vmatprep.subr.mxu0 0.0
        %537 = vmatpush1.msra.mxu0 %v497
        %538 = vmatprep.subr.mxu0 0.0
        %539 = vmatpush1.msra.mxu0 %v498
        %540 = vmatprep.subr.mxu0 0.0
        %541 = vmatpush1.msra.mxu0 %v499
        %542 = vmatprep.subr.mxu0 0.0
        %543 = vmatpush1.msra.mxu0 %v500
        %544 = vmatprep.subr.mxu0 0.0
        %545 = vmatpush1.msra.mxu0 %v501
        %546 = vmatprep.subr.mxu0 0.0
        %547 = vmatpush1.msra.mxu0 %v502
        %548 = vmatprep.subr.mxu0 0.0
        %549 = vmatpush1.msra.mxu0 %v503
        %550 = vmatprep.subr.mxu0 0.0
        %551 = vmatpush1.msra.mxu0 %v504
        %552 = vmatprep.subr.mxu0 0.0
        %553 = vmatpush1.msra.mxu0 %v505
        %554 = vmatprep.subr.mxu0 0.0
        %555 = vmatpush1.msra.mxu0 0.0
        %556 = vmatprep.subr.mxu0 0.0
        %557 = vmatpush1.msra.mxu0 0.0
        %558 = vmatprep.subr.mxu0 0.0
        %559 = vmatpush1.msra.mxu0 0.0
        %560 = vmatprep.subr.mxu0 0.0
        %561 = vmatpush1.msra.mxu0 0.0
        %562 = vmatprep.subr.mxu0 0.0
        %563 = vmatpush1.msra.mxu0 0.0
        %564 = vmatprep.subr.mxu0 0.0
        %565 = vmatpush1.msra.mxu0 0.0
        %566 = vmatprep.subr.mxu0 0.0
        %567 = vmatpush1.msra.mxu0 0.0
        %568 = vmatprep.subr.mxu0 0.0
        %569 = vmatpush1.msra.mxu0 0.0
        %570 = vmatprep.subr.mxu0 0.0
        %571 = vmatpush1.msra.mxu0 0.0
        %572 = vmatprep.subr.mxu0 0.0
        %573 = vmatpush1.msra.mxu0 0.0
        %574 = vmatprep.subr.mxu0 0.0
        %575 = vmatpush1.msra.mxu0 0.0
        %576 = vmatprep.subr.mxu0 0.0
        %577 = vmatpush1.msra.mxu0 0.0
        %578 = vmatprep.subr.mxu0 0.0
        %579 = vmatpush1.msra.mxu0 0.0
        %580 = vmatprep.subr.mxu0 0.0
        %581 = vmatpush1.msra.mxu0 0.0
        %582 = vmatprep.subr.mxu0 0.0
        %583 = vmatpush1.msra.mxu0 0.0
        %584 = vmatprep.subr.mxu0 0.0
        %585 = vmatpush1.msra.mxu0 0.0
        %586 = vmatprep.mubr.f32.mxu0 0.0
        %587 = vmatmul.mubr.f32.gmra.mrb[0].mxu0 %v470
        %v588 = vpop.f32.mrb[0].mxu0
        %v589 = vadd.f32 0.0, %v588
        %v590 = vpop.f32.mrb[0].mxu0
        %591 = vmatprep.mubr.f32.mxu0 0.0
        %592 = vmatmul.mubr.f32.gmra.mrb[0].mxu0 %v471
        %v593 = vpop.f32.mrb[0].mxu0
        %v594 = vadd.f32 0.0, %v593
        %v595 = vpop.f32.mrb[0].mxu0
        %596 = vmatprep.mubr.f32.mxu0 0.0
        %597 = vmatmul.mubr.f32.gmra.mrb[0].mxu0 %v472
        %v598 = vpop.f32.mrb[0].mxu0
        %v599 = vadd.f32 0.0, %v598
        %v600 = vpop.f32.mrb[0].mxu0
        %601 = vmatprep.mubr.f32.mxu0 0.0
        %602 = vmatmul.mubr.f32.gmra.mrb[0].mxu0 %v473
        %v603 = vpop.f32.mrb[0].mxu0
        %v604 = vadd.f32 0.0, %v603
        %v605 = vpop.f32.mrb[0].mxu0
        %606 = vmatprep.mubr.f32.mxu0 0.0
        %607 = vmatmul.mubr.f32.gmra.mrb[0].mxu0 %v474
        %v608 = vpop.f32.mrb[0].mxu0
        %v609 = vadd.f32 0.0, %v608
        %v610 = vpop.f32.mrb[0].mxu0
        %611 = vmatprep.mubr.f32.mxu0 0.0
        %612 = vmatmul.mubr.f32.gmra.mrb[0].mxu0 %v475
        %v613 = vpop.f32.mrb[0].mxu0
        %v614 = vadd.f32 0.0, %v613
        %v615 = vpop.f32.mrb[0].mxu0
        %616 = vmatprep.mubr.f32.mxu0 0.0
        %617 = vmatmul.mubr.f32.gmra.mrb[0].mxu0 %v476
        %v618 = vpop.f32.mrb[0].mxu0
        %v619 = vadd.f32 0.0, %v618
        %v620 = vpop.f32.mrb[0].mxu0
        %621 = vmatprep.mubr.f32.mxu0 0.0
        %622 = vmatmul.mubr.f32.gmra.mrb[0].mxu0 %v477
        %v623 = vpop.f32.mrb[0].mxu0
        %v624 = vadd.f32 0.0, %v623
        %v625 = vpop.f32.mrb[0].mxu0
        %626 = vmatprep.mubr.f32.mxu0 0.0
        %627 = vmatmul.mubr.f32.gmra.mrb[0].mxu0 %v478
        %v628 = vpop.f32.mrb[0].mxu0
        %v629 = vadd.f32 0.0, %v628
        %v630 = vpop.f32.mrb[0].mxu0
        %631 = vmatprep.mubr.f32.mxu0 0.0
        %632 = vmatmul.mubr.f32.gmra.mrb[0].mxu0 %v479
        %v633 = vpop.f32.mrb[0].mxu0
        %v634 = vadd.f32 0.0, %v633
        %v635 = vpop.f32.mrb[0].mxu0
        %636 = vmatprep.mubr.f32.mxu0 0.0
        %637 = vmatmul.mubr.f32.gmra.mrb[0].mxu0 %v480
        %v638 = vpop.f32.mrb[0].mxu0
        %v639 = vadd.f32 0.0, %v638
        %v640 = vpop.f32.mrb[0].mxu0
        %641 = vmatprep.mubr.f32.mxu0 0.0
        %642 = vmatmul.mubr.f32.gmra.mrb[0].mxu0 %v481
        %v643 = vpop.f32.mrb[0].mxu0
        %v644 = vadd.f32 0.0, %v643
        %v645 = vpop.f32.mrb[0].mxu0
        %646 = vmatprep.mubr.f32.mxu0 0.0
        %647 = vmatmul.mubr.f32.gmra.mrb[0].mxu0 %v482
        %v648 = vpop.f32.mrb[0].mxu0
        %v649 = vadd.f32 0.0, %v648
        %v650 = vpop.f32.mrb[0].mxu0
        %651 = vmatprep.mubr.f32.mxu0 0.0
        %652 = vmatmul.mubr.f32.gmra.mrb[0].mxu0 %v483
        %v653 = vpop.f32.mrb[0].mxu0
        %v654 = vadd.f32 0.0, %v653
        %v655 = vpop.f32.mrb[0].mxu0
        %656 = vmatprep.mubr.f32.mxu0 0.0
        %657 = vmatmul.mubr.f32.gmra.mrb[0].mxu0 %v484
        %v658 = vpop.f32.mrb[0].mxu0
        %v659 = vadd.f32 0.0, %v658
        %v660 = vpop.f32.mrb[0].mxu0
        %661 = vmatprep.mubr.f32.mxu0 0.0
        %662 = vmatmul.mubr.f32.gmra.mrb[0].mxu0 %v485
        %v663 = vpop.f32.mrb[0].mxu0
        %v664 = vadd.f32 0.0, %v663
        %v665 = vpop.f32.mrb[0].mxu0
        %666 = vdwg.mxu0
        %v667 = vadd.f32 %v506, %v589
        %v668 = vadd.f32 %v507, %v594
        %v669 = vadd.f32 %v508, %v599
        %v670 = vadd.f32 %v509, %v604
        %v671 = vadd.f32 %v510, %v609
        %v672 = vadd.f32 %v511, %v614
        %v673 = vadd.f32 %v512, %v619
        %v674 = vadd.f32 %v513, %v624
        %v675 = vadd.f32 %v514, %v629
        %v676 = vadd.f32 %v515, %v634
        %v677 = vadd.f32 %v516, %v639
        %v678 = vadd.f32 %v517, %v644
        %v679 = vadd.f32 %v518, %v649
        %v680 = vadd.f32 %v519, %v654
        %v681 = vadd.f32 %v520, %v659
        %v682 = vadd.f32 %v521, %v664
        %683 = vst [vmem:[#allocation3] sm:$0xff] %v667
        %684 = vst [vmem:[#allocation3 + $0x8] sm:$0xff] %v668
        %685 = vst [vmem:[#allocation3 + $0x10] sm:$0xff] %v669
        %686 = vst [vmem:[#allocation3 + $0x18] sm:$0xff] %v670
        %687 = vst [vmem:[#allocation3 + $0x20] sm:$0xff] %v671
        %688 = vst [vmem:[#allocation3 + $0x28] sm:$0xff] %v672
        %689 = vst [vmem:[#allocation3 + $0x30] sm:$0xff] %v673
        %690 = vst [vmem:[#allocation3 + $0x38] sm:$0xff] %v674
        %691 = vst [vmem:[#allocation3 + $0x40] sm:$0xff] %v675
        %692 = vst [vmem:[#allocation3 + $0x48] sm:$0xff] %v676
        %693 = vst [vmem:[#allocation3 + $0x50] sm:$0xff] %v677
        %694 = vst [vmem:[#allocation3 + $0x58] sm:$0xff] %v678
        %695 = vst [vmem:[#allocation3 + $0x60] sm:$0xff] %v679
        %696 = vst [vmem:[#allocation3 + $0x68] sm:$0xff] %v680
        %697 = vst [vmem:[#allocation3 + $0x70] sm:$0xff] %v681
        %698 = vst [vmem:[#allocation3 + $0x78] sm:$0xff] %v682
        // Predicated region
        $region69: #{tpu_custom_call.1} parent=43 // pred_check
          %p699 = pneg %p391
        $region70: #{tpu_custom_call.1} parent=43 // pred_check_branch
          %701 = sbr.rel (%p699) target = $region72
        $region71: #{tpu_custom_call.1} parent=43 // pred_region
          %s702 = smul.u32 %s26, 128
          %s703 = sadd.s32 %s702, %s487
          %s704 = scalar_lea.vmem [#allocation2], %s703
          %v705 = vld [vmem:[%s704] sm:$0xff]
          %v706 = vld [vmem:[%s704 + $0x8] sm:$0xff]
          %v707 = vld [vmem:[%s704 + $0x10] sm:$0xff]
          %v708 = vld [vmem:[%s704 + $0x18] sm:$0xff]
          %v709 = vld [vmem:[%s704 + $0x20] sm:$0xff]
          %v710 = vld [vmem:[%s704 + $0x28] sm:$0xff]
          %v711 = vld [vmem:[%s704 + $0x30] sm:$0xff]
          %v712 = vld [vmem:[%s704 + $0x38] sm:$0xff]
          %v713 = vld [vmem:[%s704 + $0x40] sm:$0xff]
          %v714 = vld [vmem:[%s704 + $0x48] sm:$0xff]
          %v715 = vld [vmem:[%s704 + $0x50] sm:$0xff]
          %v716 = vld [vmem:[%s704 + $0x58] sm:$0xff]
          %v717 = vld [vmem:[%s704 + $0x60] sm:$0xff]
          %v718 = vld [vmem:[%s704 + $0x68] sm:$0xff]
          %v719 = vld [vmem:[%s704 + $0x70] sm:$0xff]
          %v720 = vld [vmem:[%s704 + $0x78] sm:$0xff]
          %v721 = vld [vmem:[#allocation3] sm:$0xff]
          %v722 = vld [vmem:[#allocation3 + $0x8] sm:$0xff]
          %v723 = vld [vmem:[#allocation3 + $0x10] sm:$0xff]
          %v724 = vld [vmem:[#allocation3 + $0x18] sm:$0xff]
          %v725 = vld [vmem:[#allocation3 + $0x20] sm:$0xff]
          %v726 = vld [vmem:[#allocation3 + $0x28] sm:$0xff]
          %v727 = vld [vmem:[#allocation3 + $0x30] sm:$0xff]
          %v728 = vld [vmem:[#allocation3 + $0x38] sm:$0xff]
          %v729 = vld [vmem:[#allocation3 + $0x40] sm:$0xff]
          %v730 = vld [vmem:[#allocation3 + $0x48] sm:$0xff]
          %v731 = vld [vmem:[#allocation3 + $0x50] sm:$0xff]
          %v732 = vld [vmem:[#allocation3 + $0x58] sm:$0xff]
          %v733 = vld [vmem:[#allocation3 + $0x60] sm:$0xff]
          %v734 = vld [vmem:[#allocation3 + $0x68] sm:$0xff]
          %v735 = vld [vmem:[#allocation3 + $0x70] sm:$0xff]
          %v736 = vld [vmem:[#allocation3 + $0x78] sm:$0xff]
          %v737 = vadd.f32 %v721, %v705
          %v738 = vadd.f32 %v722, %v706
          %v739 = vadd.f32 %v723, %v707
          %v740 = vadd.f32 %v724, %v708
          %v741 = vadd.f32 %v725, %v709
          %v742 = vadd.f32 %v726, %v710
          %v743 = vadd.f32 %v727, %v711
          %v744 = vadd.f32 %v728, %v712
          %v745 = vadd.f32 %v729, %v713
          %v746 = vadd.f32 %v730, %v714
          %v747 = vadd.f32 %v731, %v715
          %v748 = vadd.f32 %v732, %v716
          %v749 = vadd.f32 %v733, %v717
          %v750 = vadd.f32 %v734, %v718
          %v751 = vadd.f32 %v735, %v719
          %v752 = vadd.f32 %v736, %v720
          %v753 = vld [vmem:[%s335] sm:$0xff]
          %v754 = vld [vmem:[%s335 + $0x8] sm:$0xff]
          %v755 = vld [vmem:[%s335 + $0x10] sm:$0xff]
          %v756 = vld [vmem:[%s335 + $0x18] sm:$0xff]
          %v757 = vld [vmem:[%s335 + $0x20] sm:$0xff]
          %v758 = vld [vmem:[%s335 + $0x28] sm:$0xff]
          %v759 = vld [vmem:[%s335 + $0x30] sm:$0xff]
          %v760 = vld [vmem:[%s335 + $0x38] sm:$0xff]
          %v761 = vld [vmem:[%s335 + $0x40] sm:$0xff]
          %v762 = vld [vmem:[%s335 + $0x48] sm:$0xff]
          %v763 = vld [vmem:[%s335 + $0x50] sm:$0xff]
          %v764 = vld [vmem:[%s335 + $0x58] sm:$0xff]
          %v765 = vld [vmem:[%s335 + $0x60] sm:$0xff]
          %v766 = vld [vmem:[%s335 + $0x68] sm:$0xff]
          %v767 = vld [vmem:[%s335 + $0x70] sm:$0xff]
          %v768 = vld [vmem:[%s335 + $0x78] sm:$0xff]
          %v769 = vld [vmem:[%s382] sm:$0x1]
          %v771 = vlaneseq
          %v772 = vshrl.u32 %v771, 7
          %v773 = vsub.s32 0, %v772
          %v774 = vrot.slane %v769, %v773
          %776 = vmatprep.subr.mxu0 0.0
          %777 = vmatpush1.msra.mxu0 %v753
          %778 = vmatprep.subr.mxu0 0.0
          %779 = vmatpush1.msra.mxu0 %v754
          %780 = vmatprep.subr.mxu0 0.0
          %781 = vmatpush1.msra.mxu0 %v755
          %782 = vmatprep.subr.mxu0 0.0
          %783 = vmatpush1.msra.mxu0 %v756
          %784 = vmatprep.subr.mxu0 0.0
          %785 = vmatpush1.msra.mxu0 %v757
          %786 = vmatprep.subr.mxu0 0.0
          %787 = vmatpush1.msra.mxu0 %v758
          %788 = vmatprep.subr.mxu0 0.0
          %789 = vmatpush1.msra.mxu0 %v759
          %790 = vmatprep.subr.mxu0 0.0
          %791 = vmatpush1.msra.mxu0 %v760
          %792 = vmatprep.subr.mxu0 0.0
          %793 = vmatpush1.msra.mxu0 %v761
          %794 = vmatprep.subr.mxu0 0.0
          %795 = vmatpush1.msra.mxu0 %v762
          %796 = vmatprep.subr.mxu0 0.0
          %797 = vmatpush1.msra.mxu0 %v763
          %798 = vmatprep.subr.mxu0 0.0
          %799 = vmatpush1.msra.mxu0 %v764
          %800 = vmatprep.subr.mxu0 0.0
          %801 = vmatpush1.msra.mxu0 %v765
          %802 = vmatprep.subr.mxu0 0.0
          %803 = vmatpush1.msra.mxu0 %v766
          %804 = vmatprep.subr.mxu0 0.0
          %805 = vmatpush1.msra.mxu0 %v767
          %806 = vmatprep.subr.mxu0 0.0
          %807 = vmatpush1.msra.mxu0 %v768
          %808 = vmatprep.subr.mxu0 0.0
          %809 = vmatpush1.msra.mxu0 0.0
          %810 = vmatprep.subr.mxu0 0.0
          %811 = vmatpush1.msra.mxu0 0.0
          %812 = vmatprep.subr.mxu0 0.0
          %813 = vmatpush1.msra.mxu0 0.0
          %814 = vmatprep.subr.mxu0 0.0
          %815 = vmatpush1.msra.mxu0 0.0
          %816 = vmatprep.subr.mxu0 0.0
          %817 = vmatpush1.msra.mxu0 0.0
          %818 = vmatprep.subr.mxu0 0.0
          %819 = vmatpush1.msra.mxu0 0.0
          %820 = vmatprep.subr.mxu0 0.0
          %821 = vmatpush1.msra.mxu0 0.0
          %822 = vmatprep.subr.mxu0 0.0
          %823 = vmatpush1.msra.mxu0 0.0
          %824 = vmatprep.subr.mxu0 0.0
          %825 = vmatpush1.msra.mxu0 0.0
          %826 = vmatprep.subr.mxu0 0.0
          %827 = vmatpush1.msra.mxu0 0.0
          %828 = vmatprep.subr.mxu0 0.0
          %829 = vmatpush1.msra.mxu0 0.0
          %830 = vmatprep.subr.mxu0 0.0
          %831 = vmatpush1.msra.mxu0 0.0
          %832 = vmatprep.subr.mxu0 0.0
          %833 = vmatpush1.msra.mxu0 0.0
          %834 = vmatprep.subr.mxu0 0.0
          %835 = vmatpush1.msra.mxu0 0.0
          %836 = vmatprep.subr.mxu0 0.0
          %837 = vmatpush1.msra.mxu0 0.0
          %838 = vmatprep.subr.mxu0 0.0
          %839 = vmatpush1.msra.mxu0 0.0
          %840 = vmatprep.mubr.f32.mxu0 0.0
          %841 = vmatmul.mubr.f32.gmra.mrb[0].mxu0 %v737
          %v842 = vpop.f32.mrb[0].mxu0
          %v843 = vadd.f32 %v774, %v842
          %v844 = vpop.f32.mrb[0].mxu0
          %845 = vmatprep.mubr.f32.mxu0 0.0
          %846 = vmatmul.mubr.f32.gmra.mrb[0].mxu0 %v738
          %v847 = vpop.f32.mrb[0].mxu0
          %v848 = vadd.f32 %v774, %v847
          %v849 = vpop.f32.mrb[0].mxu0
          %850 = vmatprep.mubr.f32.mxu0 0.0
          %851 = vmatmul.mubr.f32.gmra.mrb[0].mxu0 %v739
          %v852 = vpop.f32.mrb[0].mxu0
          %v853 = vadd.f32 %v774, %v852
          %v854 = vpop.f32.mrb[0].mxu0
          %855 = vmatprep.mubr.f32.mxu0 0.0
          %856 = vmatmul.mubr.f32.gmra.mrb[0].mxu0 %v740
          %v857 = vpop.f32.mrb[0].mxu0
          %v858 = vadd.f32 %v774, %v857
          %v859 = vpop.f32.mrb[0].mxu0
          %860 = vmatprep.mubr.f32.mxu0 0.0
          %861 = vmatmul.mubr.f32.gmra.mrb[0].mxu0 %v741
          %v862 = vpop.f32.mrb[0].mxu0
          %v863 = vadd.f32 %v774, %v862
          %v864 = vpop.f32.mrb[0].mxu0
          %865 = vmatprep.mubr.f32.mxu0 0.0
          %866 = vmatmul.mubr.f32.gmra.mrb[0].mxu0 %v742
          %v867 = vpop.f32.mrb[0].mxu0
          %v868 = vadd.f32 %v774, %v867
          %v869 = vpop.f32.mrb[0].mxu0
          %870 = vmatprep.mubr.f32.mxu0 0.0
          %871 = vmatmul.mubr.f32.gmra.mrb[0].mxu0 %v743
          %v872 = vpop.f32.mrb[0].mxu0
          %v873 = vadd.f32 %v774, %v872
          %v874 = vpop.f32.mrb[0].mxu0
          %875 = vmatprep.mubr.f32.mxu0 0.0
          %876 = vmatmul.mubr.f32.gmra.mrb[0].mxu0 %v744
          %v877 = vpop.f32.mrb[0].mxu0
          %v878 = vadd.f32 %v774, %v877
          %v879 = vpop.f32.mrb[0].mxu0
          %880 = vmatprep.mubr.f32.mxu0 0.0
          %881 = vmatmul.mubr.f32.gmra.mrb[0].mxu0 %v745
          %v882 = vpop.f32.mrb[0].mxu0
          %v883 = vadd.f32 %v774, %v882
          %v884 = vpop.f32.mrb[0].mxu0
          %885 = vmatprep.mubr.f32.mxu0 0.0
          %886 = vmatmul.mubr.f32.gmra.mrb[0].mxu0 %v746
          %v887 = vpop.f32.mrb[0].mxu0
          %v888 = vadd.f32 %v774, %v887
          %v889 = vpop.f32.mrb[0].mxu0
          %890 = vmatprep.mubr.f32.mxu0 0.0
          %891 = vmatmul.mubr.f32.gmra.mrb[0].mxu0 %v747
          %v892 = vpop.f32.mrb[0].mxu0
          %v893 = vadd.f32 %v774, %v892
          %v894 = vpop.f32.mrb[0].mxu0
          %895 = vmatprep.mubr.f32.mxu0 0.0
          %896 = vmatmul.mubr.f32.gmra.mrb[0].mxu0 %v748
          %v897 = vpop.f32.mrb[0].mxu0
          %v898 = vadd.f32 %v774, %v897
          %v899 = vpop.f32.mrb[0].mxu0
          %900 = vmatprep.mubr.f32.mxu0 0.0
          %901 = vmatmul.mubr.f32.gmra.mrb[0].mxu0 %v749
          %v902 = vpop.f32.mrb[0].mxu0
          %v903 = vadd.f32 %v774, %v902
          %v904 = vpop.f32.mrb[0].mxu0
          %905 = vmatprep.mubr.f32.mxu0 0.0
          %906 = vmatmul.mubr.f32.gmra.mrb[0].mxu0 %v750
          %v907 = vpop.f32.mrb[0].mxu0
          %v908 = vadd.f32 %v774, %v907
          %v909 = vpop.f32.mrb[0].mxu0
          %910 = vmatprep.mubr.f32.mxu0 0.0
          %911 = vmatmul.mubr.f32.gmra.mrb[0].mxu0 %v751
          %v912 = vpop.f32.mrb[0].mxu0
          %v913 = vadd.f32 %v774, %v912
          %v914 = vpop.f32.mrb[0].mxu0
          %915 = vmatprep.mubr.f32.mxu0 0.0
          %916 = vmatmul.mubr.f32.gmra.mrb[0].mxu0 %v752
          %v917 = vpop.f32.mrb[0].mxu0
          %v918 = vadd.f32 %v774, %v917
          %v919 = vpop.f32.mrb[0].mxu0
          %920 = vdwg.mxu0
          %v921 = vmax.f32 %v843, 0.0
          %v922 = vmax.f32 %v848, 0.0
          %v923 = vmax.f32 %v853, 0.0
          %v924 = vmax.f32 %v858, 0.0
          %v925 = vmax.f32 %v863, 0.0
          %v926 = vmax.f32 %v868, 0.0
          %v927 = vmax.f32 %v873, 0.0
          %v928 = vmax.f32 %v878, 0.0
          %v929 = vmax.f32 %v883, 0.0
          %v930 = vmax.f32 %v888, 0.0
          %v931 = vmax.f32 %v893, 0.0
          %v932 = vmax.f32 %v898, 0.0
          %v933 = vmax.f32 %v903, 0.0
          %v934 = vmax.f32 %v908, 0.0
          %v935 = vmax.f32 %v913, 0.0
          %v936 = vmax.f32 %v918, 0.0
          %v937 = vld [vmem:[%s344] sm:$0xff]
          %v938 = vld [vmem:[%s344 + $0x8] sm:$0xff]
          %v939 = vld [vmem:[%s344 + $0x10] sm:$0xff]
          %v940 = vld [vmem:[%s344 + $0x18] sm:$0xff]
          %v941 = vld [vmem:[%s344 + $0x20] sm:$0xff]
          %v942 = vld [vmem:[%s344 + $0x28] sm:$0xff]
          %v943 = vld [vmem:[%s344 + $0x30] sm:$0xff]
          %v944 = vld [vmem:[%s344 + $0x38] sm:$0xff]
          %v945 = vld [vmem:[%s344 + $0x40] sm:$0xff]
          %v946 = vld [vmem:[%s344 + $0x48] sm:$0xff]
          %v947 = vld [vmem:[%s344 + $0x50] sm:$0xff]
          %v948 = vld [vmem:[%s344 + $0x58] sm:$0xff]
          %v949 = vld [vmem:[%s344 + $0x60] sm:$0xff]
          %v950 = vld [vmem:[%s344 + $0x68] sm:$0xff]
          %v951 = vld [vmem:[%s344 + $0x70] sm:$0xff]
          %v952 = vld [vmem:[%s344 + $0x78] sm:$0xff]
          %v953 = vld [vmem:[%s385] sm:$0x1]
          %v955 = vlaneseq
          %v956 = vshrl.u32 %v955, 7
          %v957 = vsub.s32 0, %v956
          %v958 = vrot.slane %v953, %v957
          %960 = vmatprep.subr.mxu0 0.0
          %961 = vmatpush1.msra.mxu0 %v937
          %962 = vmatprep.subr.mxu0 0.0
          %963 = vmatpush1.msra.mxu0 %v938
          %964 = vmatprep.subr.mxu0 0.0
          %965 = vmatpush1.msra.mxu0 %v939
          %966 = vmatprep.subr.mxu0 0.0
          %967 = vmatpush1.msra.mxu0 %v940
          %968 = vmatprep.subr.mxu0 0.0
          %969 = vmatpush1.msra.mxu0 %v941
          %970 = vmatprep.subr.mxu0 0.0
          %971 = vmatpush1.msra.mxu0 %v942
          %972 = vmatprep.subr.mxu0 0.0
          %973 = vmatpush1.msra.mxu0 %v943
          %974 = vmatprep.subr.mxu0 0.0
          %975 = vmatpush1.msra.mxu0 %v944
          %976 = vmatprep.subr.mxu0 0.0
          %977 = vmatpush1.msra.mxu0 %v945
          %978 = vmatprep.subr.mxu0 0.0
          %979 = vmatpush1.msra.mxu0 %v946
          %980 = vmatprep.subr.mxu0 0.0
          %981 = vmatpush1.msra.mxu0 %v947
          %982 = vmatprep.subr.mxu0 0.0
          %983 = vmatpush1.msra.mxu0 %v948
          %984 = vmatprep.subr.mxu0 0.0
          %985 = vmatpush1.msra.mxu0 %v949
          %986 = vmatprep.subr.mxu0 0.0
          %987 = vmatpush1.msra.mxu0 %v950
          %988 = vmatprep.subr.mxu0 0.0
          %989 = vmatpush1.msra.mxu0 %v951
          %990 = vmatprep.subr.mxu0 0.0
          %991 = vmatpush1.msra.mxu0 %v952
          %992 = vmatprep.subr.mxu0 0.0
          %993 = vmatpush1.msra.mxu0 0.0
          %994 = vmatprep.subr.mxu0 0.0
          %995 = vmatpush1.msra.mxu0 0.0
          %996 = vmatprep.subr.mxu0 0.0
          %997 = vmatpush1.msra.mxu0 0.0
          %998 = vmatprep.subr.mxu0 0.0
          %999 = vmatpush1.msra.mxu0 0.0
          %1000 = vmatprep.subr.mxu0 0.0
          %1001 = vmatpush1.msra.mxu0 0.0
          %1002 = vmatprep.subr.mxu0 0.0
          %1003 = vmatpush1.msra.mxu0 0.0
          %1004 = vmatprep.subr.mxu0 0.0
          %1005 = vmatpush1.msra.mxu0 0.0
          %1006 = vmatprep.subr.mxu0 0.0
          %1007 = vmatpush1.msra.mxu0 0.0
          %1008 = vmatprep.subr.mxu0 0.0
          %1009 = vmatpush1.msra.mxu0 0.0
          %1010 = vmatprep.subr.mxu0 0.0
          %1011 = vmatpush1.msra.mxu0 0.0
          %1012 = vmatprep.subr.mxu0 0.0
          %1013 = vmatpush1.msra.mxu0 0.0
          %1014 = vmatprep.subr.mxu0 0.0
          %1015 = vmatpush1.msra.mxu0 0.0
          %1016 = vmatprep.subr.mxu0 0.0
          %1017 = vmatpush1.msra.mxu0 0.0
          %1018 = vmatprep.subr.mxu0 0.0
          %1019 = vmatpush1.msra.mxu0 0.0
          %1020 = vmatprep.subr.mxu0 0.0
          %1021 = vmatpush1.msra.mxu0 0.0
          %1022 = vmatprep.subr.mxu0 0.0
          %1023 = vmatpush1.msra.mxu0 0.0
          %1024 = vmatprep.mubr.f32.mxu0 0.0
          %1025 = vmatmul.mubr.f32.gmra.mrb[0].mxu0 %v921
          %v1026 = vpop.f32.mrb[0].mxu0
          %v1027 = vadd.f32 %v958, %v1026
          %v1028 = vpop.f32.mrb[0].mxu0
          %1029 = vmatprep.mubr.f32.mxu0 0.0
          %1030 = vmatmul.mubr.f32.gmra.mrb[0].mxu0 %v922
          %v1031 = vpop.f32.mrb[0].mxu0
          %v1032 = vadd.f32 %v958, %v1031
          %v1033 = vpop.f32.mrb[0].mxu0
          %1034 = vmatprep.mubr.f32.mxu0 0.0
          %1035 = vmatmul.mubr.f32.gmra.mrb[0].mxu0 %v923
          %v1036 = vpop.f32.mrb[0].mxu0
          %v1037 = vadd.f32 %v958, %v1036
          %v1038 = vpop.f32.mrb[0].mxu0
          %1039 = vmatprep.mubr.f32.mxu0 0.0
          %1040 = vmatmul.mubr.f32.gmra.mrb[0].mxu0 %v924
          %v1041 = vpop.f32.mrb[0].mxu0
          %v1042 = vadd.f32 %v958, %v1041
          %v1043 = vpop.f32.mrb[0].mxu0
          %1044 = vmatprep.mubr.f32.mxu0 0.0
          %1045 = vmatmul.mubr.f32.gmra.mrb[0].mxu0 %v925
          %v1046 = vpop.f32.mrb[0].mxu0
          %v1047 = vadd.f32 %v958, %v1046
          %v1048 = vpop.f32.mrb[0].mxu0
          %1049 = vmatprep.mubr.f32.mxu0 0.0
          %1050 = vmatmul.mubr.f32.gmra.mrb[0].mxu0 %v926
          %v1051 = vpop.f32.mrb[0].mxu0
          %v1052 = vadd.f32 %v958, %v1051
          %v1053 = vpop.f32.mrb[0].mxu0
          %1054 = vmatprep.mubr.f32.mxu0 0.0
          %1055 = vmatmul.mubr.f32.gmra.mrb[0].mxu0 %v927
          %v1056 = vpop.f32.mrb[0].mxu0
          %v1057 = vadd.f32 %v958, %v1056
          %v1058 = vpop.f32.mrb[0].mxu0
          %1059 = vmatprep.mubr.f32.mxu0 0.0
          %1060 = vmatmul.mubr.f32.gmra.mrb[0].mxu0 %v928
          %v1061 = vpop.f32.mrb[0].mxu0
          %v1062 = vadd.f32 %v958, %v1061
          %v1063 = vpop.f32.mrb[0].mxu0
          %1064 = vmatprep.mubr.f32.mxu0 0.0
          %1065 = vmatmul.mubr.f32.gmra.mrb[0].mxu0 %v929
          %v1066 = vpop.f32.mrb[0].mxu0
          %v1067 = vadd.f32 %v958, %v1066
          %v1068 = vpop.f32.mrb[0].mxu0
          %1069 = vmatprep.mubr.f32.mxu0 0.0
          %1070 = vmatmul.mubr.f32.gmra.mrb[0].mxu0 %v930
          %v1071 = vpop.f32.mrb[0].mxu0
          %v1072 = vadd.f32 %v958, %v1071
          %v1073 = vpop.f32.mrb[0].mxu0
          %1074 = vmatprep.mubr.f32.mxu0 0.0
          %1075 = vmatmul.mubr.f32.gmra.mrb[0].mxu0 %v931
          %v1076 = vpop.f32.mrb[0].mxu0
          %v1077 = vadd.f32 %v958, %v1076
          %v1078 = vpop.f32.mrb[0].mxu0
          %1079 = vmatprep.mubr.f32.mxu0 0.0
          %1080 = vmatmul.mubr.f32.gmra.mrb[0].mxu0 %v932
          %v1081 = vpop.f32.mrb[0].mxu0
          %v1082 = vadd.f32 %v958, %v1081
          %v1083 = vpop.f32.mrb[0].mxu0
          %1084 = vmatprep.mubr.f32.mxu0 0.0
          %1085 = vmatmul.mubr.f32.gmra.mrb[0].mxu0 %v933
          %v1086 = vpop.f32.mrb[0].mxu0
          %v1087 = vadd.f32 %v958, %v1086
          %v1088 = vpop.f32.mrb[0].mxu0
          %1089 = vmatprep.mubr.f32.mxu0 0.0
          %1090 = vmatmul.mubr.f32.gmra.mrb[0].mxu0 %v934
          %v1091 = vpop.f32.mrb[0].mxu0
          %v1092 = vadd.f32 %v958, %v1091
          %v1093 = vpop.f32.mrb[0].mxu0
          %1094 = vmatprep.mubr.f32.mxu0 0.0
          %1095 = vmatmul.mubr.f32.gmra.mrb[0].mxu0 %v935
          %v1096 = vpop.f32.mrb[0].mxu0
          %v1097 = vadd.f32 %v958, %v1096
          %v1098 = vpop.f32.mrb[0].mxu0
          %1099 = vmatprep.mubr.f32.mxu0 0.0
          %1100 = vmatmul.mubr.f32.gmra.mrb[0].mxu0 %v936
          %v1101 = vpop.f32.mrb[0].mxu0
          %v1102 = vadd.f32 %v958, %v1101
          %v1103 = vpop.f32.mrb[0].mxu0
          %1104 = vdwg.mxu0
          %v1105 = vmax.f32 %v1027, 0.0
          %v1106 = vmax.f32 %v1032, 0.0
          %v1107 = vmax.f32 %v1037, 0.0
          %v1108 = vmax.f32 %v1042, 0.0
          %v1109 = vmax.f32 %v1047, 0.0
          %v1110 = vmax.f32 %v1052, 0.0
          %v1111 = vmax.f32 %v1057, 0.0
          %v1112 = vmax.f32 %v1062, 0.0
          %v1113 = vmax.f32 %v1067, 0.0
          %v1114 = vmax.f32 %v1072, 0.0
          %v1115 = vmax.f32 %v1077, 0.0
          %v1116 = vmax.f32 %v1082, 0.0
          %v1117 = vmax.f32 %v1087, 0.0
          %v1118 = vmax.f32 %v1092, 0.0
          %v1119 = vmax.f32 %v1097, 0.0
          %v1120 = vmax.f32 %v1102, 0.0
          %s1121 = smul.u32 %s434, 128
          %s1122 = sadd.s32 %s702, %s1121
          %s1123 = scalar_lea.vmem [#allocation2], %s1122
          %1124 = vst [vmem:[%s1123] sm:$0xff] %v1105
          %1125 = vst [vmem:[%s1123 + $0x8] sm:$0xff] %v1106
          %1126 = vst [vmem:[%s1123 + $0x10] sm:$0xff] %v1107
          %1127 = vst [vmem:[%s1123 + $0x18] sm:$0xff] %v1108
          %1128 = vst [vmem:[%s1123 + $0x20] sm:$0xff] %v1109
          %1129 = vst [vmem:[%s1123 + $0x28] sm:$0xff] %v1110
          %1130 = vst [vmem:[%s1123 + $0x30] sm:$0xff] %v1111
          %1131 = vst [vmem:[%s1123 + $0x38] sm:$0xff] %v1112
          %1132 = vst [vmem:[%s1123 + $0x40] sm:$0xff] %v1113
          %1133 = vst [vmem:[%s1123 + $0x48] sm:$0xff] %v1114
          %1134 = vst [vmem:[%s1123 + $0x50] sm:$0xff] %v1115
          %1135 = vst [vmem:[%s1123 + $0x58] sm:$0xff] %v1116
          %1136 = vst [vmem:[%s1123 + $0x60] sm:$0xff] %v1117
          %1137 = vst [vmem:[%s1123 + $0x68] sm:$0xff] %v1118
          %1138 = vst [vmem:[%s1123 + $0x70] sm:$0xff] %v1119
          %1139 = vst [vmem:[%s1123 + $0x78] sm:$0xff] %v1120
          %1140 = vst [vmem:[#allocation11] sm:$0xff] %v1027
          %1141 = vst [vmem:[#allocation11 + $0x8] sm:$0xff] %v1032
          %1142 = vst [vmem:[#allocation11 + $0x10] sm:$0xff] %v1037
          %1143 = vst [vmem:[#allocation11 + $0x18] sm:$0xff] %v1042
          %1144 = vst [vmem:[#allocation11 + $0x20] sm:$0xff] %v1047
          %1145 = vst [vmem:[#allocation11 + $0x28] sm:$0xff] %v1052
          %1146 = vst [vmem:[#allocation11 + $0x30] sm:$0xff] %v1057
          %1147 = vst [vmem:[#allocation11 + $0x38] sm:$0xff] %v1062
          %1148 = vst [vmem:[#allocation11 + $0x40] sm:$0xff] %v1067
          %1149 = vst [vmem:[#allocation11 + $0x48] sm:$0xff] %v1072
          %1150 = vst [vmem:[#allocation11 + $0x50] sm:$0xff] %v1077
          %1151 = vst [vmem:[#allocation11 + $0x58] sm:$0xff] %v1082
          %1152 = vst [vmem:[#allocation11 + $0x60] sm:$0xff] %v1087
          %1153 = vst [vmem:[#allocation11 + $0x68] sm:$0xff] %v1092
          %1154 = vst [vmem:[#allocation11 + $0x70] sm:$0xff] %v1097
          %1155 = vst [vmem:[#allocation11 + $0x78] sm:$0xff] %v1102
        $region72: #{tpu_custom_call.1} parent=43 // pred_fallthru
          _
        // Predicated region
        $region73: #{tpu_custom_call.1} parent=43 // pred_check
          %p1156 = pneg %p210
        $region74: #{tpu_custom_call.1} parent=43 // pred_check_branch
          %1158 = sbr.rel (%p1156) target = $region76
        $region75: #{tpu_custom_call.1} parent=43 // pred_region
          %s1159 = smul.u32 16, %s26
          %s1161 = ssub.s32 2048, 2048
          %1162 = vsyncadd [#allocation6], %s1161
          %s1163 = smul.addr %s1159, 128
          %s1164 = scalar_lea.hbm %s6, %s1163
          %s1165 = sshll.u32 [#allocation11], 4
          %s1166 = int_to_ptr.vmem [resolvable:$true] %s1165
          %1171 = dma.vmem_to_hbm [thread:$0]  %s1166, 2048, %s1164, [#allocation6], 128, 128, 8
        $region76: #{tpu_custom_call.1} parent=43 // pred_fallthru
          _
        // Predicated region
        $region77: #{tpu_custom_call.1} parent=43 // pred_check
          %p1172 = pneg %p210
        $region78: #{tpu_custom_call.1} parent=43 // pred_check_branch
          %1174 = sbr.rel (%p1172) target = $region80
        $region79: #{tpu_custom_call.1} parent=43 // pred_region
          %1175 = dma.done [#allocation6], 2048
        $region80: #{tpu_custom_call.1} parent=43 // pred_fallthru
          _
      $region44: #{tpu_custom_call.1} parent=5 // pred_fallthru
        _
      %p1176 = scmp.le.s32.totalorder 2, %s15
      // Predicated region
      $region81: #{tpu_custom_call.1} parent=5 // pred_check
        %p1177 = pneg %p1176
      $region82: #{tpu_custom_call.1} parent=5 // pred_check_branch
        %1179 = sbr.rel (%p1177) target = $region84
      $region83: #{tpu_custom_call.1} parent=5 // pred_region
        %s1180 = ssub.s32 %s15, 2
      $region84: #{tpu_custom_call.1} parent=5 // pred_fallthru
        _
    $region6: #{tpu_custom_call.1} parent=1 // loop_footer
      %s19 = sadd.s32 1, %s15
    $region7: #{tpu_custom_call.1} parent=1 // loop_footer_branch
      %14 = sbr.rel target = $region3
    $region8: #{tpu_custom_call.1} parent=1 // loop_exit
      _
    %1181 = vsyncpa [#allocation5], 1
    %s1182 = scalar_lea.sflag [#allocation5], 1
    %1183 = vsyncpa %s1182, 1
    %1184 = vsyncpa [#allocation8], 1
    %1185 = vsyncpa [#allocation6], 1
    %s1186 = scalar_lea.sflag [#allocation6], 1
    %1187 = vsyncpa %s1186, 1

</llo_original>
